<compile_context>
chip_gen: v6e
topology: v6e:2x2x1
jax: 0.10.0
libtpu: 0.0.40
codegen_flags: <defaults>
</compile_context>

<pallas_src>
import jax
import jax.numpy as jnp
from jax.experimental import pallas as pl
from jax.experimental.pallas import tpu as pltpu

# ----------------------------------------------------------------------------
# Model dimensions
# ----------------------------------------------------------------------------
LATENT_Y = 16
LATENT_D = 8
N_CLASSES = 10
N_DOMAINS = 2
HIDDEN = 128

# ----------------------------------------------------------------------------
# Lane-dense packing layout
# ----------------------------------------------------------------------------
Z_SLAB = 64                       # packed latent slab: [z_y | z_d | zero pad]
MOM_SLAB = 2 * Z_SLAB             # packed moments slab: [mu slab | logvar slab]
LOGIT_SLAB = 128                  # packed logits slab

COL_MU_Y = slice(0, LATENT_Y)                                   # moments cols
COL_MU_D = slice(LATENT_Y, LATENT_Y + LATENT_D)
COL_LV_Y = slice(Z_SLAB, Z_SLAB + LATENT_Y)
COL_LV_D = slice(Z_SLAB + LATENT_Y, Z_SLAB + LATENT_Y + LATENT_D)
COL_LABEL = slice(0, N_CLASSES)                                 # logits cols
COL_DOMAIN = slice(N_CLASSES, N_CLASSES + N_DOMAINS)
ROW_ZY = slice(0, LATENT_Y)                                     # z-slab rows
ROW_ZD = slice(LATENT_Y, LATENT_Y + LATENT_D)


# ----------------------------------------------------------------------------
# Fused forward kernel
# ----------------------------------------------------------------------------
def _fused_vae_kernel(
    x_ref, eps_ref,
    w_enc_ref, b_enc_ref,
    w_heads_ref, b_heads_ref,
    w_dy1_ref, b_dy1_ref, w_dy2_ref, b_dy2_ref,
    w_dd1_ref, b_dd1_ref, w_dd2_ref, b_dd2_ref,
    w_cls_ref, b_cls_ref,
    recon_y_ref, recon_d_ref, moments_ref, logits_ref,
):
    f32 = jnp.float32
    bf16 = jnp.bfloat16

    # ---- Encoder trunk: h = relu(x @ W_enc + b_enc) ----
    h = jnp.dot(x_ref[...], w_enc_ref[...], preferred_element_type=f32)
    h = jnp.maximum(h + b_enc_ref[...], 0.0)
    h_bf = h.astype(bf16)

    # ---- 4 encoder heads fused into one lane-dense (hidden, 128) matmul ----
    # column layout: [mu_y | mu_d | 0-pad | logvar_y | logvar_d | 0-pad]
    moments = jnp.dot(h_bf, w_heads_ref[...], preferred_element_type=f32)
    moments = moments + b_heads_ref[...]
    moments_ref[...] = moments.astype(moments_ref.dtype)

    mu_slab = moments[:, :Z_SLAB]       # [mu_y | mu_d | 0]
    lv_slab = moments[:, Z_SLAB:]       # [lv_y | lv_d | 0]

    # ---- Reparameterization (fused f32 elementwise; eps pad cols are zero) ----
    z_slab = mu_slab + eps_ref[...] * jnp.exp(0.5 * lv_slab)
    z_bf = z_slab.astype(bf16)          # [z_y | z_d | 0]

    # ---- Decoder y (padded weight rows select z_y only) ----
    hy = jnp.dot(z_bf, w_dy1_ref[...], preferred_element_type=f32) + b_dy1_ref[...]
    hy = jnp.maximum(hy, 0.0).astype(bf16)
    ry = jnp.dot(hy, w_dy2_ref[...], preferred_element_type=f32) + b_dy2_ref[...]
    recon_y_ref[...] = jax.nn.sigmoid(ry).astype(recon_y_ref.dtype)

    # ---- Decoder d (padded weight rows select z_d only) ----
    hd = jnp.dot(z_bf, w_dd1_ref[...], preferred_element_type=f32) + b_dd1_ref[...]
    hd = jnp.maximum(hd, 0.0).astype(bf16)
    rd = jnp.dot(hd, w_dd2_ref[...], preferred_element_type=f32) + b_dd2_ref[...]
    recon_d_ref[...] = jax.nn.sigmoid(rd).astype(recon_d_ref.dtype)

    # ---- Both classifiers as one padded matmul (GRL = identity in forward) ----
    # column layout: [label logits | domain logits | 0-pad]
    logits = jnp.dot(z_bf, w_cls_ref[...], preferred_element_type=f32) + b_cls_ref[...]
    logits_ref[...] = logits.astype(logits_ref.dtype)


# ----------------------------------------------------------------------------
# Parameter construction (deterministic, module-style), then fused packing
# ----------------------------------------------------------------------------
def init_params(key, in_dim, hidden, latent_y, latent_d,
                n_classes=N_CLASSES, n_domains=N_DOMAINS):
    def dense(k, din, dout):
        kw, kb = jax.random.split(k)
        scale = 1.0 / jnp.sqrt(din)
        w = jax.random.uniform(kw, (din, dout), jnp.float32, -scale, scale)
        b = jax.random.uniform(kb, (dout,), jnp.float32, -scale, scale)
        return w, b

    keys = jax.random.split(key, 11)
    return {
        "enc_fc":    dense(keys[0], in_dim, hidden),
        "enc_mu_y":  dense(keys[1], hidden, latent_y),
        "enc_lv_y":  dense(keys[2], hidden, latent_y),
        "enc_mu_d":  dense(keys[3], hidden, latent_d),
        "enc_lv_d":  dense(keys[4], hidden, latent_d),
        "dec_y_fc1": dense(keys[5], latent_y, hidden),
        "dec_y_fc2": dense(keys[6], hidden, in_dim),
        "dec_d_fc1": dense(keys[7], latent_d, hidden),
        "dec_d_fc2": dense(keys[8], hidden, in_dim),
        "label_cls": dense(keys[9], latent_y, n_classes),
        "domain_cls": dense(keys[10], latent_d, n_domains),
    }


def pack_params(params):
    """Pack per-layer params into zero-padded, lane-dense fused operands (bf16 matmul weights)."""
    f32, bf16 = jnp.float32, jnp.bfloat16
    w_enc, b_enc = params["enc_fc"]
    hidden = w_enc.shape[1]

    # Fused encoder-head weight: (hidden, 128) -> [mu_y | mu_d | 0 | lv_y | lv_d | 0]
    w_heads = jnp.zeros((hidden, MOM_SLAB), f32)
    w_heads = w_heads.at[:, COL_MU_Y].set(params["enc_mu_y"][0])
    w_heads = w_heads.at[:, COL_MU_D].set(params["enc_mu_d"][0])
    w_heads = w_heads.at[:, COL_LV_Y].set(params["enc_lv_y"][0])
    w_heads = w_heads.at[:, COL_LV_D].set(params["enc_lv_d"][0])
    b_heads = jnp.zeros((MOM_SLAB,), f32)
    b_heads = b_heads.at[COL_MU_Y].set(params["enc_mu_y"][1])
    b_heads = b_heads.at[COL_MU_D].set(params["enc_mu_d"][1])
    b_heads = b_heads.at[COL_LV_Y].set(params["enc_lv_y"][1])
    b_heads = b_heads.at[COL_LV_D].set(params["enc_lv_d"][1])

    # Decoder fc1 weights padded to take the packed (B, 64) z-slab directly.
    w_dy1 = jnp.zeros((Z_SLAB, hidden), f32).at[ROW_ZY, :].set(params["dec_y_fc1"][0])
    w_dd1 = jnp.zeros((Z_SLAB, hidden), f32).at[ROW_ZD, :].set(params["dec_d_fc1"][0])

    # Both classifiers packed into one (64, 128) weight.
    w_cls = jnp.zeros((Z_SLAB, LOGIT_SLAB), f32)
    w_cls = w_cls.at[ROW_ZY, COL_LABEL].set(params["label_cls"][0])
    w_cls = w_cls.at[ROW_ZD, COL_DOMAIN].set(params["domain_cls"][0])
    b_cls = jnp.zeros((LOGIT_SLAB,), f32)
    b_cls = b_cls.at[COL_LABEL].set(params["label_cls"][1])
    b_cls = b_cls.at[COL_DOMAIN].set(params["domain_cls"][1])

    return (
        w_enc.astype(bf16),                    b_enc.reshape(1, -1),
        w_heads.astype(bf16),                  b_heads.reshape(1, -1),
        w_dy1.astype(bf16),                    params["dec_y_fc1"][1].reshape(1, -1),
        params["dec_y_fc2"][0].astype(bf16),   params["dec_y_fc2"][1].reshape(1, -1),
        w_dd1.astype(bf16),                    params["dec_d_fc1"][1].reshape(1, -1),
        params["dec_d_fc2"][0].astype(bf16),   params["dec_d_fc2"][1].reshape(1, -1),
        w_cls.astype(bf16),                    b_cls.reshape(1, -1),
    )


# ----------------------------------------------------------------------------
# Forward pass (mirrors DisentangledVAE.forward)
# ----------------------------------------------------------------------------
def disentangled_vae_forward(fused_params, x, eps_y, eps_d):
    B, C, H, W = x.shape
    in_dim = C * H * W
    x_flat = x.reshape(B, in_dim).astype(jnp.bfloat16)   # like x.view(B, -1)

    # eps packed into the same z-slab layout; zero padding -> z pad cols stay 0.
    eps = jnp.concatenate(
        [eps_y, eps_d, jnp.zeros((B, Z_SLAB - LATENT_Y - LATENT_D), jnp.float32)],
        axis=-1,
    )

    vmem = pl.BlockSpec(memory_space=pltpu.MemorySpace.VMEM)
    recon_y, recon_d, moments, logits = pl.pallas_call(
        _fused_vae_kernel,
        out_shape=(
            jax.ShapeDtypeStruct((B, in_dim), jnp.float32),
            jax.ShapeDtypeStruct((B, in_dim), jnp.float32),
            jax.ShapeDtypeStruct((B, MOM_SLAB), jnp.float32),
            jax.ShapeDtypeStruct((B, LOGIT_SLAB), jnp.float32),
        ),
        in_specs=[vmem] * 16,
        out_specs=(vmem, vmem, vmem, vmem),
        compiler_params=pltpu.CompilerParams(vmem_limit_bytes=32 * 1024 * 1024),
    )(x_flat, eps, *fused_params)

    # Unpack the lane-dense slabs (cheap XLA slices).
    mu_y = moments[:, COL_MU_Y]
    logvar_y = moments[:, COL_LV_Y]
    mu_d = moments[:, COL_MU_D]
    logvar_d = moments[:, COL_LV_D]
    label_logits = logits[:, COL_LABEL]
    domain_logits = logits[:, COL_DOMAIN]
    x_recon_y = recon_y.reshape(B, C, H, W)
    x_recon_d = recon_d.reshape(B, C, H, W)
    return (x_recon_y, x_recon_d, mu_y, logvar_y, mu_d, logvar_d,
            label_logits, domain_logits)


# ----------------------------------------------------------------------------
# Pure-JAX reference (f32) for a loose numerical sanity check
# ----------------------------------------------------------------------------
def reference_forward(params, x, eps_y, eps_d):
    B = x.shape[0]
    xf = x.reshape(B, -1)
    lin = lambda v, wb: v @ wb[0] + wb[1]
    relu = lambda v: jnp.maximum(v, 0.0)
    h = relu(lin(xf, params["enc_fc"]))
    mu_y, lv_y = lin(h, params["enc_mu_y"]), lin(h, params["enc_lv_y"])
    mu_d, lv_d = lin(h, params["enc_mu_d"]), lin(h, params["enc_lv_d"])
    z_y = mu_y + eps_y * jnp.exp(0.5 * lv_y)
    z_d = mu_d + eps_d * jnp.exp(0.5 * lv_d)
    ry = jax.nn.sigmoid(lin(relu(lin(z_y, params["dec_y_fc1"])), params["dec_y_fc2"])).reshape(x.shape)
    rd = jax.nn.sigmoid(lin(relu(lin(z_d, params["dec_d_fc1"])), params["dec_d_fc2"])).reshape(x.shape)
    return (ry, rd, mu_y, lv_y, mu_d, lv_d,
            lin(z_y, params["label_cls"]), lin(z_d, params["domain_cls"]))


# ----------------------------------------------------------------------------
# Main
# ----------------------------------------------------------------------------
if __name__ == "__main__":
    B, C, H, W = 2, 4, 16, 16
    IN_DIM = C * H * W

    key = jax.random.PRNGKey(0)
    k_x, k_p, k_ey, k_ed = jax.random.split(key, 4)

    x = jax.random.normal(k_x, (B, C, H, W), dtype=jnp.float32)
    params = init_params(k_p, IN_DIM, HIDDEN, LATENT_Y, LATENT_D)
    fused_params = pack_params(params)

    # eps ~ N(0, 1), drawn deterministically (torch.randn_like equivalent)
    eps_y = jax.random.normal(k_ey, (B, LATENT_Y), dtype=jnp.float32)
    eps_d = jax.random.normal(k_ed, (B, LATENT_D), dtype=jnp.float32)

    fwd = jax.jit(disentangled_vae_forward)
    outs = jax.block_until_ready(fwd(fused_params, x, eps_y, eps_d))

    # Shape checks
    assert outs[0].shape == (B, C, H, W)
    assert outs[1].shape == (B, C, H, W)
    assert outs[2].shape == (B, LATENT_Y) and outs[3].shape == (B, LATENT_Y)
    assert outs[4].shape == (B, LATENT_D) and outs[5].shape == (B, LATENT_D)
    assert outs[6].shape == (B, N_CLASSES)
    assert outs[7].shape == (B, N_DOMAINS)

    # Loose numerical check vs pure-JAX f32 reference (bf16 matmul weights in-kernel)
    refs = reference_forward(params, x, eps_y, eps_d)
    for got, ref in zip(outs, refs):
        assert bool(jnp.all(jnp.isfinite(got)))
        assert bool(jnp.allclose(got, ref, atol=5e-2, rtol=5e-2))

    print("KERNEL_OK")
</pallas_src>

<mosaic_0001>
module attributes {stable_mosaic.version = 11 : i64} {
  func.func @_fused_vae_kernel(%arg0: memref<2x1024xbf16, #tpu.memory_space<vmem>>, %arg1: memref<2x64xf32, #tpu.memory_space<vmem>>, %arg2: memref<1024x128xbf16, #tpu.memory_space<vmem>>, %arg3: memref<1x128xf32, #tpu.memory_space<vmem>>, %arg4: memref<128x128xbf16, #tpu.memory_space<vmem>>, %arg5: memref<1x128xf32, #tpu.memory_space<vmem>>, %arg6: memref<64x128xbf16, #tpu.memory_space<vmem>>, %arg7: memref<1x128xf32, #tpu.memory_space<vmem>>, %arg8: memref<128x1024xbf16, #tpu.memory_space<vmem>>, %arg9: memref<1x1024xf32, #tpu.memory_space<vmem>>, %arg10: memref<64x128xbf16, #tpu.memory_space<vmem>>, %arg11: memref<1x128xf32, #tpu.memory_space<vmem>>, %arg12: memref<128x1024xbf16, #tpu.memory_space<vmem>>, %arg13: memref<1x1024xf32, #tpu.memory_space<vmem>>, %arg14: memref<64x128xbf16, #tpu.memory_space<vmem>>, %arg15: memref<1x128xf32, #tpu.memory_space<vmem>>, %arg16: memref<2x1024xf32, #tpu.memory_space<vmem>>, %arg17: memref<2x1024xf32, #tpu.memory_space<vmem>>, %arg18: memref<2x128xf32, #tpu.memory_space<vmem>>, %arg19: memref<2x128xf32, #tpu.memory_space<vmem>>) attributes {dimension_semantics = [], scalar_prefetch = 0 : i64, scratch_operands = 0 : i64, tpu.core_type = #tpu.core_type<tc>} {
    %c0 = arith.constant 0 : index
    %c0_0 = arith.constant 0 : index
    %0 = vector.load %arg0[%c0, %c0_0] : memref<2x1024xbf16, #tpu.memory_space<vmem>>, vector<2x1024xbf16>
    %c0_1 = arith.constant 0 : index
    %c0_2 = arith.constant 0 : index
    %1 = vector.load %arg2[%c0_1, %c0_2] : memref<1024x128xbf16, #tpu.memory_space<vmem>>, vector<1024x128xbf16>
    %cst = arith.constant dense<0.000000e+00> : vector<2x128xf32>
    %2 = tpu.matmul %0, %1, %cst {dimension_numbers = #tpu.dot_dimension_numbers<[1], [0], [0], [1], [0, 0, 1, 1], [], []>} : vector<2x1024xbf16>, vector<1024x128xbf16>, vector<2x128xf32> -> vector<2x128xf32>
    %c0_3 = arith.constant 0 : index
    %c0_4 = arith.constant 0 : index
    %3 = vector.load %arg3[%c0_3, %c0_4] : memref<1x128xf32, #tpu.memory_space<vmem>>, vector<1x128xf32>
    %4 = vector.broadcast %3 : vector<1x128xf32> to vector<2x128xf32>
    %5 = arith.addf %2, %4 : vector<2x128xf32>
    %cst_5 = arith.constant 0.000000e+00 : f32
    %6 = vector.broadcast %cst_5 : f32 to vector<2x128xf32>
    %7 = arith.maximumf %5, %6 : vector<2x128xf32>
    %8 = arith.truncf %7 : vector<2x128xf32> to vector<2x128xbf16>
    %c0_6 = arith.constant 0 : index
    %c0_7 = arith.constant 0 : index
    %9 = vector.load %arg4[%c0_6, %c0_7] : memref<128x128xbf16, #tpu.memory_space<vmem>>, vector<128x128xbf16>
    %cst_8 = arith.constant dense<0.000000e+00> : vector<2x128xf32>
    %10 = tpu.matmul %8, %9, %cst_8 {dimension_numbers = #tpu.dot_dimension_numbers<[1], [0], [0], [1], [0, 0, 1, 1], [], []>} : vector<2x128xbf16>, vector<128x128xbf16>, vector<2x128xf32> -> vector<2x128xf32>
    %c0_9 = arith.constant 0 : index
    %c0_10 = arith.constant 0 : index
    %11 = vector.load %arg5[%c0_9, %c0_10] : memref<1x128xf32, #tpu.memory_space<vmem>>, vector<1x128xf32>
    %12 = vector.broadcast %11 : vector<1x128xf32> to vector<2x128xf32>
    %13 = arith.addf %10, %12 : vector<2x128xf32>
    %c0_11 = arith.constant 0 : index
    %c0_12 = arith.constant 0 : index
    %14 = vector.load %arg18[%c0_11, %c0_12] : memref<2x128xf32, #tpu.memory_space<vmem>>, vector<2x128xf32>
    tpu.vector_store %arg18[%c0_11, %c0_12], %13 {strides = array<i32>} : memref<2x128xf32, #tpu.memory_space<vmem>>, vector<2x128xf32>,
    %15 = vector.extract_strided_slice %13 {offsets = [0, 0], sizes = [2, 64], strides = [1, 1]} : vector<2x128xf32> to vector<2x64xf32>
    %16 = vector.extract_strided_slice %13 {offsets = [0, 64], sizes = [2, 64], strides = [1, 1]} : vector<2x128xf32> to vector<2x64xf32>
    %c0_13 = arith.constant 0 : index
    %c0_14 = arith.constant 0 : index
    %17 = vector.load %arg1[%c0_13, %c0_14] : memref<2x64xf32, #tpu.memory_space<vmem>>, vector<2x64xf32>
    %cst_15 = arith.constant 5.000000e-01 : f32
    %18 = vector.broadcast %cst_15 : f32 to vector<2x64xf32>
    %19 = arith.mulf %18, %16 : vector<2x64xf32>
    %20 = math.exp %19 : vector<2x64xf32>
    %21 = arith.mulf %17, %20 : vector<2x64xf32>
    %22 = arith.addf %15, %21 : vector<2x64xf32>
    %23 = arith.truncf %22 : vector<2x64xf32> to vector<2x64xbf16>
    %c0_16 = arith.constant 0 : index
    %c0_17 = arith.constant 0 : index
    %24 = vector.load %arg6[%c0_16, %c0_17] : memref<64x128xbf16, #tpu.memory_space<vmem>>, vector<64x128xbf16>
    %cst_18 = arith.constant dense<0.000000e+00> : vector<2x128xf32>
    %25 = tpu.matmul %23, %24, %cst_18 {dimension_numbers = #tpu.dot_dimension_numbers<[1], [0], [0], [1], [0, 0, 1, 1], [], []>} : vector<2x64xbf16>, vector<64x128xbf16>, vector<2x128xf32> -> vector<2x128xf32>
    %c0_19 = arith.constant 0 : index
    %c0_20 = arith.constant 0 : index
    %26 = vector.load %arg7[%c0_19, %c0_20] : memref<1x128xf32, #tpu.memory_space<vmem>>, vector<1x128xf32>
    %27 = vector.broadcast %26 : vector<1x128xf32> to vector<2x128xf32>
    %28 = arith.addf %25, %27 : vector<2x128xf32>
    %cst_21 = arith.constant 0.000000e+00 : f32
    %29 = vector.broadcast %cst_21 : f32 to vector<2x128xf32>
    %30 = arith.maximumf %28, %29 : vector<2x128xf32>
    %31 = arith.truncf %30 : vector<2x128xf32> to vector<2x128xbf16>
    %c0_22 = arith.constant 0 : index
    %c0_23 = arith.constant 0 : index
    %32 = vector.load %arg8[%c0_22, %c0_23] : memref<128x1024xbf16, #tpu.memory_space<vmem>>, vector<128x1024xbf16>
    %cst_24 = arith.constant dense<0.000000e+00> : vector<2x1024xf32>
    %33 = tpu.matmul %31, %32, %cst_24 {dimension_numbers = #tpu.dot_dimension_numbers<[1], [0], [0], [1], [0, 0, 1, 1], [], []>} : vector<2x128xbf16>, vector<128x1024xbf16>, vector<2x1024xf32> -> vector<2x1024xf32>
    %c0_25 = arith.constant 0 : index
    %c0_26 = arith.constant 0 : index
    %34 = vector.load %arg9[%c0_25, %c0_26] : memref<1x1024xf32, #tpu.memory_space<vmem>>, vector<1x1024xf32>
    %35 = vector.broadcast %34 : vector<1x1024xf32> to vector<2x1024xf32>
    %36 = arith.addf %33, %35 : vector<2x1024xf32>
    %37 = arith.negf %36 : vector<2x1024xf32>
    %38 = math.exp %37 : vector<2x1024xf32>
    %cst_27 = arith.constant 1.000000e+00 : f32
    %39 = vector.broadcast %cst_27 : f32 to vector<2x1024xf32>
    %40 = arith.addf %39, %38 : vector<2x1024xf32>
    %41 = arith.divf %39, %40 : vector<2x1024xf32>
    %c0_28 = arith.constant 0 : index
    %c0_29 = arith.constant 0 : index
    %42 = vector.load %arg16[%c0_28, %c0_29] : memref<2x1024xf32, #tpu.memory_space<vmem>>, vector<2x1024xf32>
    tpu.vector_store %arg16[%c0_28, %c0_29], %41 {strides = array<i32>} : memref<2x1024xf32, #tpu.memory_space<vmem>>, vector<2x1024xf32>,
    %c0_30 = arith.constant 0 : index
    %c0_31 = arith.constant 0 : index
    %43 = vector.load %arg10[%c0_30, %c0_31] : memref<64x128xbf16, #tpu.memory_space<vmem>>, vector<64x128xbf16>
    %cst_32 = arith.constant dense<0.000000e+00> : vector<2x128xf32>
    %44 = tpu.matmul %23, %43, %cst_32 {dimension_numbers = #tpu.dot_dimension_numbers<[1], [0], [0], [1], [0, 0, 1, 1], [], []>} : vector<2x64xbf16>, vector<64x128xbf16>, vector<2x128xf32> -> vector<2x128xf32>
    %c0_33 = arith.constant 0 : index
    %c0_34 = arith.constant 0 : index
    %45 = vector.load %arg11[%c0_33, %c0_34] : memref<1x128xf32, #tpu.memory_space<vmem>>, vector<1x128xf32>
    %46 = vector.broadcast %45 : vector<1x128xf32> to vector<2x128xf32>
    %47 = arith.addf %44, %46 : vector<2x128xf32>
    %cst_35 = arith.constant 0.000000e+00 : f32
    %48 = vector.broadcast %cst_35 : f32 to vector<2x128xf32>
    %49 = arith.maximumf %47, %48 : vector<2x128xf32>
    %50 = arith.truncf %49 : vector<2x128xf32> to vector<2x128xbf16>
    %c0_36 = arith.constant 0 : index
    %c0_37 = arith.constant 0 : index
    %51 = vector.load %arg12[%c0_36, %c0_37] : memref<128x1024xbf16, #tpu.memory_space<vmem>>, vector<128x1024xbf16>
    %cst_38 = arith.constant dense<0.000000e+00> : vector<2x1024xf32>
    %52 = tpu.matmul %50, %51, %cst_38 {dimension_numbers = #tpu.dot_dimension_numbers<[1], [0], [0], [1], [0, 0, 1, 1], [], []>} : vector<2x128xbf16>, vector<128x1024xbf16>, vector<2x1024xf32> -> vector<2x1024xf32>
    %c0_39 = arith.constant 0 : index
    %c0_40 = arith.constant 0 : index
    %53 = vector.load %arg13[%c0_39, %c0_40] : memref<1x1024xf32, #tpu.memory_space<vmem>>, vector<1x1024xf32>
    %54 = vector.broadcast %53 : vector<1x1024xf32> to vector<2x1024xf32>
    %55 = arith.addf %52, %54 : vector<2x1024xf32>
    %56 = arith.negf %55 : vector<2x1024xf32>
    %57 = math.exp %56 : vector<2x1024xf32>
    %cst_41 = arith.constant 1.000000e+00 : f32
    %58 = vector.broadcast %cst_41 : f32 to vector<2x1024xf32>
    %59 = arith.addf %58, %57 : vector<2x1024xf32>
    %60 = arith.divf %58, %59 : vector<2x1024xf32>
    %c0_42 = arith.constant 0 : index
    %c0_43 = arith.constant 0 : index
    %61 = vector.load %arg17[%c0_42, %c0_43] : memref<2x1024xf32, #tpu.memory_space<vmem>>, vector<2x1024xf32>
    tpu.vector_store %arg17[%c0_42, %c0_43], %60 {strides = array<i32>} : memref<2x1024xf32, #tpu.memory_space<vmem>>, vector<2x1024xf32>,
    %c0_44 = arith.constant 0 : index
    %c0_45 = arith.constant 0 : index
    %62 = vector.load %arg14[%c0_44, %c0_45] : memref<64x128xbf16, #tpu.memory_space<vmem>>, vector<64x128xbf16>
    %cst_46 = arith.constant dense<0.000000e+00> : vector<2x128xf32>
    %63 = tpu.matmul %23, %62, %cst_46 {dimension_numbers = #tpu.dot_dimension_numbers<[1], [0], [0], [1], [0, 0, 1, 1], [], []>} : vector<2x64xbf16>, vector<64x128xbf16>, vector<2x128xf32> -> vector<2x128xf32>
    %c0_47 = arith.constant 0 : index
    %c0_48 = arith.constant 0 : index
    %64 = vector.load %arg15[%c0_47, %c0_48] : memref<1x128xf32, #tpu.memory_space<vmem>>, vector<1x128xf32>
    %65 = vector.broadcast %64 : vector<1x128xf32> to vector<2x128xf32>
    %66 = arith.addf %63, %65 : vector<2x128xf32>
    %c0_49 = arith.constant 0 : index
    %c0_50 = arith.constant 0 : index
    %67 = vector.load %arg19[%c0_49, %c0_50] : memref<2x128xf32, #tpu.memory_space<vmem>>, vector<2x128xf32>
    tpu.vector_store %arg19[%c0_49, %c0_50], %66 {strides = array<i32>} : memref<2x128xf32, #tpu.memory_space<vmem>>, vector<2x128xf32>,
    return
  }
}

</mosaic_0001>

<llo_original>
// kernel: disentangled_vae_forward.1
$region0: #{disentangled_vae_forward.1}
  #allocation0 [shape = 'u32[]', space=smem, size = 0x4, offset = 0x4, fixed_abs, tag = 'smem constant byte address 0x4 - core index']
  #allocation1 [shape = 'u32[144,128]{1,0:T(1,128)}', space=vmem, size = 0x12000, scoped, tag = 'internal scratch']
  %s0 = inlined_call_operand.vmem [shape: bf16[2,1024], index: 0, kind: input, shape index: {}]
  %s1 = inlined_call_operand.vmem [shape: f32[2,64], index: 1, kind: input, shape index: {}]
  %s2 = inlined_call_operand.hbm [shape: bf16[1024,128], index: 2, kind: input, shape index: {}]
  %s3 = inlined_call_operand.vmem [shape: f32[1,128], index: 3, kind: input, shape index: {}]
  %s4 = inlined_call_operand.vmem [shape: bf16[128,128], index: 4, kind: input, shape index: {}]
  %s5 = inlined_call_operand.vmem [shape: f32[1,128], index: 5, kind: input, shape index: {}]
  %s6 = inlined_call_operand.vmem [shape: bf16[64,128], index: 6, kind: input, shape index: {}]
  %s7 = inlined_call_operand.vmem [shape: f32[1,128], index: 7, kind: input, shape index: {}]
  %s8 = inlined_call_operand.hbm [shape: bf16[128,1024], index: 8, kind: input, shape index: {}]
  %s9 = inlined_call_operand.vmem [shape: f32[1,1024], index: 9, kind: input, shape index: {}]
  %s10 = inlined_call_operand.vmem [shape: bf16[64,128], index: 10, kind: input, shape index: {}]
  %s11 = inlined_call_operand.vmem [shape: f32[1,128], index: 11, kind: input, shape index: {}]
  %s12 = inlined_call_operand.hbm [shape: bf16[128,1024], index: 12, kind: input, shape index: {}]
  %s13 = inlined_call_operand.vmem [shape: f32[1,1024], index: 13, kind: input, shape index: {}]
  %s14 = inlined_call_operand.vmem [shape: bf16[64,128], index: 14, kind: input, shape index: {}]
  %s15 = inlined_call_operand.vmem [shape: f32[1,128], index: 15, kind: input, shape index: {}]
  %s16 = inlined_call_operand.vmem [shape: f32[2,1024], index: 16, kind: output, shape index: {0}]
  %s17 = inlined_call_operand.vmem [shape: f32[2,1024], index: 17, kind: output, shape index: {1}]
  %s18 = inlined_call_operand.vmem [shape: f32[2,128], index: 18, kind: output, shape index: {2}]
  %s19 = inlined_call_operand.vmem [shape: f32[2,128], index: 19, kind: output, shape index: {3}]
  %20 = xla_tuple %s16, %s17, %s18, %s19
  %s21 = sld [smem:[#allocation0]]
  $region110: #{disentangled_vae_forward.1} parent=0
    _
  %s23 = ssub.s32 1, %s21
  %s24 = scalar_select 0, %s23, %s21
  $region1: #{disentangled_vae_forward.1} parent=0
    #allocation2 [shape = 'u8[262144]{0}', space=vmem, size = 0x40000, scoped, tag = 'input window, operand 2, single buffered']
    #allocation3 [shape = 's32[1]{0}', space=sflag, size = 0x4, scoped, tag = 'scoped memory for disentangled_vae_forward.1']
    #allocation4 [shape = 'u8[262144]{0}', space=vmem, size = 0x40000, scoped, tag = 'input window, operand 8, single buffered']
    #allocation5 [shape = 's32[1]{0}', space=sflag, size = 0x4, scoped, tag = 'scoped memory for disentangled_vae_forward.1']
    #allocation6 [shape = 'u8[262144]{0}', space=vmem, size = 0x40000, scoped, tag = 'input window, operand 12, single buffered']
    %25 = vsyncpa [#allocation3], 0
    %26 = vsyncpa [#allocation5], 0
    // Predicated region
    $region2: #{disentangled_vae_forward.1} parent=1 // pred_check
      _
    $region3: #{disentangled_vae_forward.1} parent=1 // pred_check_branch
      %28 = sbr.rel (0) target = $region5
    $region4: #{disentangled_vae_forward.1} parent=1 // pred_region
      _
    $region5: #{disentangled_vae_forward.1} parent=1 // pred_fallthru
      _
    // Predicated region
    $region6: #{disentangled_vae_forward.1} parent=1 // pred_check
      _
    $region7: #{disentangled_vae_forward.1} parent=1 // pred_check_branch
      %30 = sbr.rel (0) target = $region9
    $region8: #{disentangled_vae_forward.1} parent=1 // pred_region
      _
    $region9: #{disentangled_vae_forward.1} parent=1 // pred_fallthru
      _
    // Predicated region
    $region10: #{disentangled_vae_forward.1} parent=1 // pred_check
      _
    $region11: #{disentangled_vae_forward.1} parent=1 // pred_check_branch
      %32 = sbr.rel (0) target = $region13
    $region12: #{disentangled_vae_forward.1} parent=1 // pred_region
      %s34 = ssub.s32 8192, 8192
      %35 = vsyncadd [#allocation3], %s34
      %s36 = sshll.u32 [#allocation2], 4
      %s37 = int_to_ptr.vmem [resolvable:$true] %s36
      %42 = dma.hbm_to_vmem [thread:$0]  %s2, 8192, %s37, [#allocation3], 64, 64, 4
    $region13: #{disentangled_vae_forward.1} parent=1 // pred_fallthru
      _
    // Predicated region
    $region14: #{disentangled_vae_forward.1} parent=1 // pred_check
      _
    $region15: #{disentangled_vae_forward.1} parent=1 // pred_check_branch
      %44 = sbr.rel (0) target = $region17
    $region16: #{disentangled_vae_forward.1} parent=1 // pred_region
      _
    $region17: #{disentangled_vae_forward.1} parent=1 // pred_fallthru
      _
    // Predicated region
    $region18: #{disentangled_vae_forward.1} parent=1 // pred_check
      _
    $region19: #{disentangled_vae_forward.1} parent=1 // pred_check_branch
      %46 = sbr.rel (0) target = $region21
    $region20: #{disentangled_vae_forward.1} parent=1 // pred_region
      _
    $region21: #{disentangled_vae_forward.1} parent=1 // pred_fallthru
      _
    // Predicated region
    $region22: #{disentangled_vae_forward.1} parent=1 // pred_check
      _
    $region23: #{disentangled_vae_forward.1} parent=1 // pred_check_branch
      %48 = sbr.rel (0) target = $region25
    $region24: #{disentangled_vae_forward.1} parent=1 // pred_region
      _
    $region25: #{disentangled_vae_forward.1} parent=1 // pred_fallthru
      _
    // Predicated region
    $region26: #{disentangled_vae_forward.1} parent=1 // pred_check
      _
    $region27: #{disentangled_vae_forward.1} parent=1 // pred_check_branch
      %50 = sbr.rel (0) target = $region29
    $region28: #{disentangled_vae_forward.1} parent=1 // pred_region
      _
    $region29: #{disentangled_vae_forward.1} parent=1 // pred_fallthru
      _
    // Predicated region
    $region30: #{disentangled_vae_forward.1} parent=1 // pred_check
      _
    $region31: #{disentangled_vae_forward.1} parent=1 // pred_check_branch
      %52 = sbr.rel (0) target = $region33
    $region32: #{disentangled_vae_forward.1} parent=1 // pred_region
      _
    $region33: #{disentangled_vae_forward.1} parent=1 // pred_fallthru
      _
    // Predicated region
    $region34: #{disentangled_vae_forward.1} parent=1 // pred_check
      _
    $region35: #{disentangled_vae_forward.1} parent=1 // pred_check_branch
      %54 = sbr.rel (0) target = $region37
    $region36: #{disentangled_vae_forward.1} parent=1 // pred_region
      %s56 = ssub.s32 8192, 8192
      %57 = vsyncadd [#allocation5], %s56
      %s58 = sshll.u32 [#allocation4], 4
      %s59 = int_to_ptr.vmem [resolvable:$true] %s58
      %64 = dma.hbm_to_vmem [thread:$0]  %s8, 8192, %s59, [#allocation5], 512, 512, 32
    $region37: #{disentangled_vae_forward.1} parent=1 // pred_fallthru
      _
    // Predicated region
    $region38: #{disentangled_vae_forward.1} parent=1 // pred_check
      _
    $region39: #{disentangled_vae_forward.1} parent=1 // pred_check_branch
      %66 = sbr.rel (0) target = $region41
    $region40: #{disentangled_vae_forward.1} parent=1 // pred_region
      _
    $region41: #{disentangled_vae_forward.1} parent=1 // pred_fallthru
      _
    // Predicated region
    $region42: #{disentangled_vae_forward.1} parent=1 // pred_check
      _
    $region43: #{disentangled_vae_forward.1} parent=1 // pred_check_branch
      %68 = sbr.rel (0) target = $region45
    $region44: #{disentangled_vae_forward.1} parent=1 // pred_region
      _
    $region45: #{disentangled_vae_forward.1} parent=1 // pred_fallthru
      _
    // Predicated region
    $region46: #{disentangled_vae_forward.1} parent=1 // pred_check
      _
    $region47: #{disentangled_vae_forward.1} parent=1 // pred_check_branch
      %70 = sbr.rel (0) target = $region49
    $region48: #{disentangled_vae_forward.1} parent=1 // pred_region
      _
    $region49: #{disentangled_vae_forward.1} parent=1 // pred_fallthru
      _
    // Predicated region
    $region50: #{disentangled_vae_forward.1} parent=1 // pred_check
      _
    $region51: #{disentangled_vae_forward.1} parent=1 // pred_check_branch
      %72 = sbr.rel (0) target = $region53
    $region52: #{disentangled_vae_forward.1} parent=1 // pred_region
      %s74 = ssub.s32 8192, 8192
      %75 = vsyncadd [#allocation5], %s74
      %s76 = sshll.u32 [#allocation6], 4
      %s77 = int_to_ptr.vmem [resolvable:$true] %s76
      %82 = dma.hbm_to_vmem [thread:$0]  %s12, 8192, %s77, [#allocation5], 512, 512, 32
    $region53: #{disentangled_vae_forward.1} parent=1 // pred_fallthru
      _
    // Predicated region
    $region54: #{disentangled_vae_forward.1} parent=1 // pred_check
      _
    $region55: #{disentangled_vae_forward.1} parent=1 // pred_check_branch
      %84 = sbr.rel (0) target = $region57
    $region56: #{disentangled_vae_forward.1} parent=1 // pred_region
      _
    $region57: #{disentangled_vae_forward.1} parent=1 // pred_fallthru
      _
    // Predicated region
    $region58: #{disentangled_vae_forward.1} parent=1 // pred_check
      _
    $region59: #{disentangled_vae_forward.1} parent=1 // pred_check_branch
      %86 = sbr.rel (0) target = $region61
    $region60: #{disentangled_vae_forward.1} parent=1 // pred_region
      _
    $region61: #{disentangled_vae_forward.1} parent=1 // pred_fallthru
      _
    // Predicated region
    $region62: #{disentangled_vae_forward.1} parent=1 // pred_check
      _
    $region63: #{disentangled_vae_forward.1} parent=1 // pred_check_branch
      %88 = sbr.rel (0) target = $region65
    $region64: #{disentangled_vae_forward.1} parent=1 // pred_region
      _
    $region65: #{disentangled_vae_forward.1} parent=1 // pred_fallthru
      _
    // Predicated region
    $region66: #{disentangled_vae_forward.1} parent=1 // pred_check
      _
    $region67: #{disentangled_vae_forward.1} parent=1 // pred_check_branch
      %90 = sbr.rel (0) target = $region69
    $region68: #{disentangled_vae_forward.1} parent=1 // pred_region
      %91 = dma.done [#allocation3], 8192
    $region69: #{disentangled_vae_forward.1} parent=1 // pred_fallthru
      _
    // Predicated region
    $region70: #{disentangled_vae_forward.1} parent=1 // pred_check
      _
    $region71: #{disentangled_vae_forward.1} parent=1 // pred_check_branch
      %93 = sbr.rel (0) target = $region73
    $region72: #{disentangled_vae_forward.1} parent=1 // pred_region
      %94 = dma.done [#allocation5], 8192
    $region73: #{disentangled_vae_forward.1} parent=1 // pred_fallthru
      _
    // Predicated region
    $region74: #{disentangled_vae_forward.1} parent=1 // pred_check
      _
    $region75: #{disentangled_vae_forward.1} parent=1 // pred_check_branch
      %96 = sbr.rel (0) target = $region77
    $region76: #{disentangled_vae_forward.1} parent=1 // pred_region
      %97 = dma.done [#allocation5], 8192
    $region77: #{disentangled_vae_forward.1} parent=1 // pred_fallthru
      _
    %v99 = vld [vmem:[%s0] sm:$0xff]
    %v100 = vld [vmem:[#allocation2] sm:$0xf]
    %v101 = vld [vmem:[#allocation2 + $0x4] sm:$0xf]
    %v102 = vld [vmem:[#allocation2 + $0x8] sm:$0xf]
    %v103 = vld [vmem:[#allocation2 + $0xc] sm:$0xf]
    %v104 = vld [vmem:[#allocation2 + $0x10] sm:$0xf]
    %v105 = vld [vmem:[#allocation2 + $0x14] sm:$0xf]
    %v106 = vld [vmem:[#allocation2 + $0x18] sm:$0xf]
    %v107 = vld [vmem:[#allocation2 + $0x1c] sm:$0xf]
    %v108 = vld [vmem:[#allocation2 + $0x20] sm:$0xf]
    %v109 = vld [vmem:[#allocation2 + $0x24] sm:$0xf]
    %v110 = vld [vmem:[#allocation2 + $0x28] sm:$0xf]
    %v111 = vld [vmem:[#allocation2 + $0x2c] sm:$0xf]
    %v112 = vld [vmem:[#allocation2 + $0x30] sm:$0xf]
    %v113 = vld [vmem:[#allocation2 + $0x34] sm:$0xf]
    %v114 = vld [vmem:[#allocation2 + $0x38] sm:$0xf]
    %v115 = vld [vmem:[#allocation2 + $0x3c] sm:$0xf]
    %v116 = vld [vmem:[#allocation2 + $0x40] sm:$0xf]
    %v117 = vld [vmem:[#allocation2 + $0x44] sm:$0xf]
    %v118 = vld [vmem:[#allocation2 + $0x48] sm:$0xf]
    %v119 = vld [vmem:[#allocation2 + $0x4c] sm:$0xf]
    %v120 = vld [vmem:[#allocation2 + $0x50] sm:$0xf]
    %v121 = vld [vmem:[#allocation2 + $0x54] sm:$0xf]
    %v122 = vld [vmem:[#allocation2 + $0x58] sm:$0xf]
    %v123 = vld [vmem:[#allocation2 + $0x5c] sm:$0xf]
    %v124 = vld [vmem:[#allocation2 + $0x60] sm:$0xf]
    %v125 = vld [vmem:[#allocation2 + $0x64] sm:$0xf]
    %v126 = vld [vmem:[#allocation2 + $0x68] sm:$0xf]
    %v127 = vld [vmem:[#allocation2 + $0x6c] sm:$0xf]
    %v128 = vld [vmem:[#allocation2 + $0x70] sm:$0xf]
    %v129 = vld [vmem:[#allocation2 + $0x74] sm:$0xf]
    %v130 = vld [vmem:[#allocation2 + $0x78] sm:$0xf]
    %v131 = vld [vmem:[#allocation2 + $0x7c] sm:$0xf]
    %v132 = vld [vmem:[#allocation2 + $0x80] sm:$0xf]
    %v133 = vld [vmem:[#allocation2 + $0x84] sm:$0xf]
    %v134 = vld [vmem:[#allocation2 + $0x88] sm:$0xf]
    %v135 = vld [vmem:[#allocation2 + $0x8c] sm:$0xf]
    %v136 = vld [vmem:[#allocation2 + $0x90] sm:$0xf]
    %v137 = vld [vmem:[#allocation2 + $0x94] sm:$0xf]
    %v138 = vld [vmem:[#allocation2 + $0x98] sm:$0xf]
    %v139 = vld [vmem:[#allocation2 + $0x9c] sm:$0xf]
    %v140 = vld [vmem:[#allocation2 + $0xa0] sm:$0xf]
    %v141 = vld [vmem:[#allocation2 + $0xa4] sm:$0xf]
    %v142 = vld [vmem:[#allocation2 + $0xa8] sm:$0xf]
    %v143 = vld [vmem:[#allocation2 + $0xac] sm:$0xf]
    %v144 = vld [vmem:[#allocation2 + $0xb0] sm:$0xf]
    %v145 = vld [vmem:[#allocation2 + $0xb4] sm:$0xf]
    %v146 = vld [vmem:[#allocation2 + $0xb8] sm:$0xf]
    %v147 = vld [vmem:[#allocation2 + $0xbc] sm:$0xf]
    %v148 = vld [vmem:[#allocation2 + $0xc0] sm:$0xf]
    %v149 = vld [vmem:[#allocation2 + $0xc4] sm:$0xf]
    %v150 = vld [vmem:[#allocation2 + $0xc8] sm:$0xf]
    %v151 = vld [vmem:[#allocation2 + $0xcc] sm:$0xf]
    %v152 = vld [vmem:[#allocation2 + $0xd0] sm:$0xf]
    %v153 = vld [vmem:[#allocation2 + $0xd4] sm:$0xf]
    %v154 = vld [vmem:[#allocation2 + $0xd8] sm:$0xf]
    %v155 = vld [vmem:[#allocation2 + $0xdc] sm:$0xf]
    %v156 = vld [vmem:[#allocation2 + $0xe0] sm:$0xf]
    %v157 = vld [vmem:[#allocation2 + $0xe4] sm:$0xf]
    %v158 = vld [vmem:[#allocation2 + $0xe8] sm:$0xf]
    %v159 = vld [vmem:[#allocation2 + $0xec] sm:$0xf]
    %v160 = vld [vmem:[#allocation2 + $0xf0] sm:$0xf]
    %v161 = vld [vmem:[#allocation2 + $0xf4] sm:$0xf]
    %v162 = vld [vmem:[#allocation2 + $0xf8] sm:$0xf]
    %v163 = vld [vmem:[#allocation2 + $0xfc] sm:$0xf]
    %v164 = vld [vmem:[#allocation2 + $0x100] sm:$0xf]
    %v165 = vld [vmem:[#allocation2 + $0x104] sm:$0xf]
    %v166 = vld [vmem:[#allocation2 + $0x108] sm:$0xf]
    %v167 = vld [vmem:[#allocation2 + $0x10c] sm:$0xf]
    %v168 = vld [vmem:[#allocation2 + $0x110] sm:$0xf]
    %v169 = vld [vmem:[#allocation2 + $0x114] sm:$0xf]
    %v170 = vld [vmem:[#allocation2 + $0x118] sm:$0xf]
    %v171 = vld [vmem:[#allocation2 + $0x11c] sm:$0xf]
    %v172 = vld [vmem:[#allocation2 + $0x120] sm:$0xf]
    %v173 = vld [vmem:[#allocation2 + $0x124] sm:$0xf]
    %v174 = vld [vmem:[#allocation2 + $0x128] sm:$0xf]
    %v175 = vld [vmem:[#allocation2 + $0x12c] sm:$0xf]
    %v176 = vld [vmem:[#allocation2 + $0x130] sm:$0xf]
    %v177 = vld [vmem:[#allocation2 + $0x134] sm:$0xf]
    %v178 = vld [vmem:[#allocation2 + $0x138] sm:$0xf]
    %v179 = vld [vmem:[#allocation2 + $0x13c] sm:$0xf]
    %v180 = vld [vmem:[#allocation2 + $0x140] sm:$0xf]
    %v181 = vld [vmem:[#allocation2 + $0x144] sm:$0xf]
    %v182 = vld [vmem:[#allocation2 + $0x148] sm:$0xf]
    %v183 = vld [vmem:[#allocation2 + $0x14c] sm:$0xf]
    %v184 = vld [vmem:[#allocation2 + $0x150] sm:$0xf]
    %v185 = vld [vmem:[#allocation2 + $0x154] sm:$0xf]
    %v186 = vld [vmem:[#allocation2 + $0x158] sm:$0xf]
    %v187 = vld [vmem:[#allocation2 + $0x15c] sm:$0xf]
    %v188 = vld [vmem:[#allocation2 + $0x160] sm:$0xf]
    %v189 = vld [vmem:[#allocation2 + $0x164] sm:$0xf]
    %v190 = vld [vmem:[#allocation2 + $0x168] sm:$0xf]
    %v191 = vld [vmem:[#allocation2 + $0x16c] sm:$0xf]
    %v192 = vld [vmem:[#allocation2 + $0x170] sm:$0xf]
    %v193 = vld [vmem:[#allocation2 + $0x174] sm:$0xf]
    %v194 = vld [vmem:[#allocation2 + $0x178] sm:$0xf]
    %v195 = vld [vmem:[#allocation2 + $0x17c] sm:$0xf]
    %v196 = vld [vmem:[#allocation2 + $0x180] sm:$0xf]
    %v197 = vld [vmem:[#allocation2 + $0x184] sm:$0xf]
    %v198 = vld [vmem:[#allocation2 + $0x188] sm:$0xf]
    %v199 = vld [vmem:[#allocation2 + $0x18c] sm:$0xf]
    %v200 = vld [vmem:[#allocation2 + $0x190] sm:$0xf]
    %v201 = vld [vmem:[#allocation2 + $0x194] sm:$0xf]
    %v202 = vld [vmem:[#allocation2 + $0x198] sm:$0xf]
    %v203 = vld [vmem:[#allocation2 + $0x19c] sm:$0xf]
    %v204 = vld [vmem:[#allocation2 + $0x1a0] sm:$0xf]
    %v205 = vld [vmem:[#allocation2 + $0x1a4] sm:$0xf]
    %v206 = vld [vmem:[#allocation2 + $0x1a8] sm:$0xf]
    %v207 = vld [vmem:[#allocation2 + $0x1ac] sm:$0xf]
    %v208 = vld [vmem:[#allocation2 + $0x1b0] sm:$0xf]
    %v209 = vld [vmem:[#allocation2 + $0x1b4] sm:$0xf]
    %v210 = vld [vmem:[#allocation2 + $0x1b8] sm:$0xf]
    %v211 = vld [vmem:[#allocation2 + $0x1bc] sm:$0xf]
    %v212 = vld [vmem:[#allocation2 + $0x1c0] sm:$0xf]
    %v213 = vld [vmem:[#allocation2 + $0x1c4] sm:$0xf]
    %v214 = vld [vmem:[#allocation2 + $0x1c8] sm:$0xf]
    %v215 = vld [vmem:[#allocation2 + $0x1cc] sm:$0xf]
    %v216 = vld [vmem:[#allocation2 + $0x1d0] sm:$0xf]
    %v217 = vld [vmem:[#allocation2 + $0x1d4] sm:$0xf]
    %v218 = vld [vmem:[#allocation2 + $0x1d8] sm:$0xf]
    %v219 = vld [vmem:[#allocation2 + $0x1dc] sm:$0xf]
    %v220 = vld [vmem:[#allocation2 + $0x1e0] sm:$0xf]
    %v221 = vld [vmem:[#allocation2 + $0x1e4] sm:$0xf]
    %v222 = vld [vmem:[#allocation2 + $0x1e8] sm:$0xf]
    %v223 = vld [vmem:[#allocation2 + $0x1ec] sm:$0xf]
    %v224 = vld [vmem:[#allocation2 + $0x1f0] sm:$0xf]
    %v225 = vld [vmem:[#allocation2 + $0x1f4] sm:$0xf]
    %v226 = vld [vmem:[#allocation2 + $0x1f8] sm:$0xf]
    %v227 = vld [vmem:[#allocation2 + $0x1fc] sm:$0xf]
    %v228 = vld [vmem:[%s3] sm:$0x1]
    %v230 = vlaneseq
    %v231 = vshrl.u32 %v230, 7
    %v232 = vsub.s32 0, %v231
    %v233 = vrot.slane %v228, %v232
    %v236 = vcombine.high %v99, %v99
    %v238 = vunpack.c.l.s4 1966171168
    %v239 = vunpack.c.0.s8 %v238
    %v240 = vlaneseq
    %v241 = vshrl.u32 %v240, 7
    %v242 = vsub.s32 %v239, %v241
    %v243 = vrot.slane %v99, %v242
    %v245 = vunpack.c.l.s4 1966171168
    %v246 = vunpack.c.0.s8 %v245
    %v247 = vlaneseq
    %v248 = vshrl.u32 %v247, 7
    %v249 = vsub.s32 %v246, %v248
    %v250 = vrot.slane %v236, %v249
    %v251 = vcombine.high %v243, %v243
    %v252 = vcombine.high %v250, %v250
    %v254 = vunpack.c.l.s4 1966171168
    %v255 = vunpack.c.0.s8 %v254
    %v256 = vlaneseq
    %v257 = vshrl.u32 %v256, 7
    %v258 = vsub.s32 %v255, %v257
    %v259 = vrot.slane %v243, %v258
    %v261 = vunpack.c.l.s4 1966171168
    %v262 = vunpack.c.0.s8 %v261
    %v263 = vlaneseq
    %v264 = vshrl.u32 %v263, 7
    %v265 = vsub.s32 %v262, %v264
    %v266 = vrot.slane %v250, %v265
    %v268 = vunpack.c.l.s4 1966171168
    %v269 = vunpack.c.0.s8 %v268
    %v270 = vlaneseq
    %v271 = vshrl.u32 %v270, 7
    %v272 = vsub.s32 %v269, %v271
    %v273 = vrot.slane %v251, %v272
    %v275 = vunpack.c.l.s4 1966171168
    %v276 = vunpack.c.0.s8 %v275
    %v277 = vlaneseq
    %v278 = vshrl.u32 %v277, 7
    %v279 = vsub.s32 %v276, %v278
    %v280 = vrot.slane %v252, %v279
    %v281 = vcombine.high %v259, %v259
    %v282 = vcombine.high %v266, %v266
    %v283 = vcombine.high %v273, %v273
    %v284 = vcombine.high %v280, %v280
    %v421 = vunpack.c.l.b16 %v100
    %v422 = vunpack.c.l.b16 %v101
    %v423 = vunpack.c.l.b16 %v102
    %v424 = vunpack.c.l.b16 %v103
    %v425 = vunpack.c.l.b16 %v104
    %v426 = vunpack.c.l.b16 %v105
    %v427 = vunpack.c.l.b16 %v106
    %v428 = vunpack.c.l.b16 %v107
    %v429 = vunpack.c.l.b16 %v108
    %v430 = vunpack.c.l.b16 %v109
    %v431 = vunpack.c.l.b16 %v110
    %v432 = vunpack.c.l.b16 %v111
    %v433 = vunpack.c.l.b16 %v112
    %v434 = vunpack.c.l.b16 %v113
    %v435 = vunpack.c.l.b16 %v114
    %v436 = vunpack.c.l.b16 %v115
    %v437 = vunpack.c.l.b16 %v116
    %v438 = vunpack.c.l.b16 %v117
    %v439 = vunpack.c.l.b16 %v118
    %v440 = vunpack.c.l.b16 %v119
    %v441 = vunpack.c.l.b16 %v120
    %v442 = vunpack.c.l.b16 %v121
    %v443 = vunpack.c.l.b16 %v122
    %v444 = vunpack.c.l.b16 %v123
    %v445 = vunpack.c.l.b16 %v124
    %v446 = vunpack.c.l.b16 %v125
    %v447 = vunpack.c.l.b16 %v126
    %v448 = vunpack.c.l.b16 %v127
    %v449 = vunpack.c.l.b16 %v128
    %v450 = vunpack.c.l.b16 %v129
    %v451 = vunpack.c.l.b16 %v130
    %v452 = vunpack.c.l.b16 %v131
    %v453 = vunpack.c.l.b16 %v132
    %v454 = vunpack.c.l.b16 %v133
    %v455 = vunpack.c.l.b16 %v134
    %v456 = vunpack.c.l.b16 %v135
    %v457 = vunpack.c.l.b16 %v136
    %v458 = vunpack.c.l.b16 %v137
    %v459 = vunpack.c.l.b16 %v138
    %v460 = vunpack.c.l.b16 %v139
    %v461 = vunpack.c.l.b16 %v140
    %v462 = vunpack.c.l.b16 %v141
    %v463 = vunpack.c.l.b16 %v142
    %v464 = vunpack.c.l.b16 %v143
    %v465 = vunpack.c.l.b16 %v144
    %v466 = vunpack.c.l.b16 %v145
    %v467 = vunpack.c.l.b16 %v146
    %v468 = vunpack.c.l.b16 %v147
    %v469 = vunpack.c.l.b16 %v148
    %v470 = vunpack.c.l.b16 %v149
    %v471 = vunpack.c.l.b16 %v150
    %v472 = vunpack.c.l.b16 %v151
    %v473 = vunpack.c.l.b16 %v152
    %v474 = vunpack.c.l.b16 %v153
    %v475 = vunpack.c.l.b16 %v154
    %v476 = vunpack.c.l.b16 %v155
    %v477 = vunpack.c.l.b16 %v156
    %v478 = vunpack.c.l.b16 %v157
    %v479 = vunpack.c.l.b16 %v158
    %v480 = vunpack.c.l.b16 %v159
    %v481 = vunpack.c.l.b16 %v160
    %v482 = vunpack.c.l.b16 %v161
    %v483 = vunpack.c.l.b16 %v162
    %v484 = vunpack.c.l.b16 %v163
    %v485 = vunpack.c.l.b16 %v164
    %v486 = vunpack.c.l.b16 %v165
    %v487 = vunpack.c.l.b16 %v166
    %v488 = vunpack.c.l.b16 %v167
    %v489 = vunpack.c.l.b16 %v168
    %v490 = vunpack.c.l.b16 %v169
    %v491 = vunpack.c.l.b16 %v170
    %v492 = vunpack.c.l.b16 %v171
    %v493 = vunpack.c.l.b16 %v172
    %v494 = vunpack.c.l.b16 %v173
    %v495 = vunpack.c.l.b16 %v174
    %v496 = vunpack.c.l.b16 %v175
    %v497 = vunpack.c.l.b16 %v176
    %v498 = vunpack.c.l.b16 %v177
    %v499 = vunpack.c.l.b16 %v178
    %v500 = vunpack.c.l.b16 %v179
    %v501 = vunpack.c.l.b16 %v180
    %v502 = vunpack.c.l.b16 %v181
    %v503 = vunpack.c.l.b16 %v182
    %v504 = vunpack.c.l.b16 %v183
    %v505 = vunpack.c.l.b16 %v184
    %v506 = vunpack.c.l.b16 %v185
    %v507 = vunpack.c.l.b16 %v186
    %v508 = vunpack.c.l.b16 %v187
    %v509 = vunpack.c.l.b16 %v188
    %v510 = vunpack.c.l.b16 %v189
    %v511 = vunpack.c.l.b16 %v190
    %v512 = vunpack.c.l.b16 %v191
    %v513 = vunpack.c.l.b16 %v192
    %v514 = vunpack.c.l.b16 %v193
    %v515 = vunpack.c.l.b16 %v194
    %v516 = vunpack.c.l.b16 %v195
    %v517 = vunpack.c.l.b16 %v196
    %v518 = vunpack.c.l.b16 %v197
    %v519 = vunpack.c.l.b16 %v198
    %v520 = vunpack.c.l.b16 %v199
    %v521 = vunpack.c.l.b16 %v200
    %v522 = vunpack.c.l.b16 %v201
    %v523 = vunpack.c.l.b16 %v202
    %v524 = vunpack.c.l.b16 %v203
    %v525 = vunpack.c.l.b16 %v204
    %v526 = vunpack.c.l.b16 %v205
    %v527 = vunpack.c.l.b16 %v206
    %v528 = vunpack.c.l.b16 %v207
    %v529 = vunpack.c.l.b16 %v208
    %v530 = vunpack.c.l.b16 %v209
    %v531 = vunpack.c.l.b16 %v210
    %v532 = vunpack.c.l.b16 %v211
    %v533 = vunpack.c.l.b16 %v212
    %v534 = vunpack.c.l.b16 %v213
    %v535 = vunpack.c.l.b16 %v214
    %v536 = vunpack.c.l.b16 %v215
    %v537 = vunpack.c.l.b16 %v216
    %v538 = vunpack.c.l.b16 %v217
    %v539 = vunpack.c.l.b16 %v218
    %v540 = vunpack.c.l.b16 %v219
    %v541 = vunpack.c.l.b16 %v220
    %v542 = vunpack.c.l.b16 %v221
    %v543 = vunpack.c.l.b16 %v222
    %v544 = vunpack.c.l.b16 %v223
    %v545 = vunpack.c.l.b16 %v224
    %v546 = vunpack.c.l.b16 %v225
    %v547 = vunpack.c.l.b16 %v226
    %v548 = vunpack.c.l.b16 %v227
    %v549 = vpack.c.b16 %v422, %v421
    %v550 = vpack.c.b16 %v424, %v423
    %v551 = vpack.c.b16 %v426, %v425
    %v552 = vpack.c.b16 %v428, %v427
    %v553 = vpack.c.b16 %v430, %v429
    %v554 = vpack.c.b16 %v432, %v431
    %v555 = vpack.c.b16 %v434, %v433
    %v556 = vpack.c.b16 %v436, %v435
    %v557 = vpack.c.b16 %v438, %v437
    %v558 = vpack.c.b16 %v440, %v439
    %v559 = vpack.c.b16 %v442, %v441
    %v560 = vpack.c.b16 %v444, %v443
    %v561 = vpack.c.b16 %v446, %v445
    %v562 = vpack.c.b16 %v448, %v447
    %v563 = vpack.c.b16 %v450, %v449
    %v564 = vpack.c.b16 %v452, %v451
    %v565 = vpack.c.b16 %v454, %v453
    %v566 = vpack.c.b16 %v456, %v455
    %v567 = vpack.c.b16 %v458, %v457
    %v568 = vpack.c.b16 %v460, %v459
    %v569 = vpack.c.b16 %v462, %v461
    %v570 = vpack.c.b16 %v464, %v463
    %v571 = vpack.c.b16 %v466, %v465
    %v572 = vpack.c.b16 %v468, %v467
    %v573 = vpack.c.b16 %v470, %v469
    %v574 = vpack.c.b16 %v472, %v471
    %v575 = vpack.c.b16 %v474, %v473
    %v576 = vpack.c.b16 %v476, %v475
    %v577 = vpack.c.b16 %v478, %v477
    %v578 = vpack.c.b16 %v480, %v479
    %v579 = vpack.c.b16 %v482, %v481
    %v580 = vpack.c.b16 %v484, %v483
    %v581 = vpack.c.b16 %v486, %v485
    %v582 = vpack.c.b16 %v488, %v487
    %v583 = vpack.c.b16 %v490, %v489
    %v584 = vpack.c.b16 %v492, %v491
    %v585 = vpack.c.b16 %v494, %v493
    %v586 = vpack.c.b16 %v496, %v495
    %v587 = vpack.c.b16 %v498, %v497
    %v588 = vpack.c.b16 %v500, %v499
    %v589 = vpack.c.b16 %v502, %v501
    %v590 = vpack.c.b16 %v504, %v503
    %v591 = vpack.c.b16 %v506, %v505
    %v592 = vpack.c.b16 %v508, %v507
    %v593 = vpack.c.b16 %v510, %v509
    %v594 = vpack.c.b16 %v512, %v511
    %v595 = vpack.c.b16 %v514, %v513
    %v596 = vpack.c.b16 %v516, %v515
    %v597 = vpack.c.b16 %v518, %v517
    %v598 = vpack.c.b16 %v520, %v519
    %v599 = vpack.c.b16 %v522, %v521
    %v600 = vpack.c.b16 %v524, %v523
    %v601 = vpack.c.b16 %v526, %v525
    %v602 = vpack.c.b16 %v528, %v527
    %v603 = vpack.c.b16 %v530, %v529
    %v604 = vpack.c.b16 %v532, %v531
    %v605 = vpack.c.b16 %v534, %v533
    %v606 = vpack.c.b16 %v536, %v535
    %v607 = vpack.c.b16 %v538, %v537
    %v608 = vpack.c.b16 %v540, %v539
    %v609 = vpack.c.b16 %v542, %v541
    %v610 = vpack.c.b16 %v544, %v543
    %v611 = vpack.c.b16 %v546, %v545
    %v612 = vpack.c.b16 %v548, %v547
    %677 = vmatprep.subr.bf16.mxu0 0
    %678 = vmatpush1.bf16.msra.mxu0 %v556
    %679 = vmatprep.subr.bf16.mxu0 0
    %680 = vmatpush1.bf16.msra.mxu0 %v555
    %681 = vmatprep.subr.bf16.mxu0 0
    %682 = vmatpush1.bf16.msra.mxu0 %v554
    %683 = vmatprep.subr.bf16.mxu0 0
    %684 = vmatpush1.bf16.msra.mxu0 %v553
    %685 = vmatprep.subr.bf16.mxu0 0
    %686 = vmatpush1.bf16.msra.mxu0 %v552
    %687 = vmatprep.subr.bf16.mxu0 0
    %688 = vmatpush1.bf16.msra.mxu0 %v551
    %689 = vmatprep.subr.bf16.mxu0 0
    %690 = vmatpush1.bf16.msra.mxu0 %v550
    %691 = vmatprep.subr.bf16.mxu0 0
    %692 = vmatpush1.bf16.msra.mxu0 %v549
    %693 = vmatprep.subr.bf16.mxu0 0
    %694 = vmatpush2.bf16.msra.mxu0 %v564
    %695 = vmatprep.subr.bf16.mxu0 0
    %696 = vmatpush2.bf16.msra.mxu0 %v563
    %697 = vmatprep.subr.bf16.mxu0 0
    %698 = vmatpush2.bf16.msra.mxu0 %v562
    %699 = vmatprep.subr.bf16.mxu0 0
    %700 = vmatpush2.bf16.msra.mxu0 %v561
    %701 = vmatprep.subr.bf16.mxu0 0
    %702 = vmatpush2.bf16.msra.mxu0 %v560
    %703 = vmatprep.subr.bf16.mxu0 0
    %704 = vmatpush2.bf16.msra.mxu0 %v559
    %705 = vmatprep.subr.bf16.mxu0 0
    %706 = vmatpush2.bf16.msra.mxu0 %v558
    %707 = vmatprep.subr.bf16.mxu0 0
    %708 = vmatpush2.bf16.msra.mxu0 %v557
    %709 = vmatprep.mubr.bf16.mxu0 %v273
    %710 = vmatmul.mubr.bf16.gmra.mxu0 %v259
    %v711 = vpop.f32.mrf.mxu0
    %v712 = vadd.f32 %v233, %v711
    %v713 = vpop.f32.mrf.mxu0
    %v714 = vpop.f32.mrf.mxu0
    %v715 = vpop.f32.mrf.mxu0
    %716 = vdwg.mxu0
    %717 = vmatprep.subr.bf16.mxu0 0
    %718 = vmatpush1.bf16.msra.mxu0 %v572
    %719 = vmatprep.subr.bf16.mxu0 0
    %720 = vmatpush1.bf16.msra.mxu0 %v571
    %721 = vmatprep.subr.bf16.mxu0 0
    %722 = vmatpush1.bf16.msra.mxu0 %v570
    %723 = vmatprep.subr.bf16.mxu0 0
    %724 = vmatpush1.bf16.msra.mxu0 %v569
    %725 = vmatprep.subr.bf16.mxu0 0
    %726 = vmatpush1.bf16.msra.mxu0 %v568
    %727 = vmatprep.subr.bf16.mxu0 0
    %728 = vmatpush1.bf16.msra.mxu0 %v567
    %729 = vmatprep.subr.bf16.mxu0 0
    %730 = vmatpush1.bf16.msra.mxu0 %v566
    %731 = vmatprep.subr.bf16.mxu0 0
    %732 = vmatpush1.bf16.msra.mxu0 %v565
    %733 = vmatprep.subr.bf16.mxu0 0
    %734 = vmatpush2.bf16.msra.mxu0 %v580
    %735 = vmatprep.subr.bf16.mxu0 0
    %736 = vmatpush2.bf16.msra.mxu0 %v579
    %737 = vmatprep.subr.bf16.mxu0 0
    %738 = vmatpush2.bf16.msra.mxu0 %v578
    %739 = vmatprep.subr.bf16.mxu0 0
    %740 = vmatpush2.bf16.msra.mxu0 %v577
    %741 = vmatprep.subr.bf16.mxu0 0
    %742 = vmatpush2.bf16.msra.mxu0 %v576
    %743 = vmatprep.subr.bf16.mxu0 0
    %744 = vmatpush2.bf16.msra.mxu0 %v575
    %745 = vmatprep.subr.bf16.mxu0 0
    %746 = vmatpush2.bf16.msra.mxu0 %v574
    %747 = vmatprep.subr.bf16.mxu0 0
    %748 = vmatpush2.bf16.msra.mxu0 %v573
    %749 = vmatprep.mubr.bf16.mxu0 %v283
    %750 = vmatmul.mubr.bf16.gmra.mxu0 %v281
    %v751 = vpop.f32.mrf.mxu0
    %v752 = vadd.f32 %v712, %v751
    %v753 = vpop.f32.mrf.mxu0
    %v754 = vpop.f32.mrf.mxu0
    %v755 = vpop.f32.mrf.mxu0
    %756 = vdwg.mxu0
    %757 = vmatprep.subr.bf16.mxu0 0
    %758 = vmatpush1.bf16.msra.mxu0 %v588
    %759 = vmatprep.subr.bf16.mxu0 0
    %760 = vmatpush1.bf16.msra.mxu0 %v587
    %761 = vmatprep.subr.bf16.mxu0 0
    %762 = vmatpush1.bf16.msra.mxu0 %v586
    %763 = vmatprep.subr.bf16.mxu0 0
    %764 = vmatpush1.bf16.msra.mxu0 %v585
    %765 = vmatprep.subr.bf16.mxu0 0
    %766 = vmatpush1.bf16.msra.mxu0 %v584
    %767 = vmatprep.subr.bf16.mxu0 0
    %768 = vmatpush1.bf16.msra.mxu0 %v583
    %769 = vmatprep.subr.bf16.mxu0 0
    %770 = vmatpush1.bf16.msra.mxu0 %v582
    %771 = vmatprep.subr.bf16.mxu0 0
    %772 = vmatpush1.bf16.msra.mxu0 %v581
    %773 = vmatprep.subr.bf16.mxu0 0
    %774 = vmatpush2.bf16.msra.mxu0 %v596
    %775 = vmatprep.subr.bf16.mxu0 0
    %776 = vmatpush2.bf16.msra.mxu0 %v595
    %777 = vmatprep.subr.bf16.mxu0 0
    %778 = vmatpush2.bf16.msra.mxu0 %v594
    %779 = vmatprep.subr.bf16.mxu0 0
    %780 = vmatpush2.bf16.msra.mxu0 %v593
    %781 = vmatprep.subr.bf16.mxu0 0
    %782 = vmatpush2.bf16.msra.mxu0 %v592
    %783 = vmatprep.subr.bf16.mxu0 0
    %784 = vmatpush2.bf16.msra.mxu0 %v591
    %785 = vmatprep.subr.bf16.mxu0 0
    %786 = vmatpush2.bf16.msra.mxu0 %v590
    %787 = vmatprep.subr.bf16.mxu0 0
    %788 = vmatpush2.bf16.msra.mxu0 %v589
    %789 = vmatprep.mubr.bf16.mxu0 %v280
    %790 = vmatmul.mubr.bf16.gmra.mxu0 %v266
    %v791 = vpop.f32.mrf.mxu0
    %v792 = vadd.f32 %v752, %v791
    %v793 = vpop.f32.mrf.mxu0
    %v794 = vpop.f32.mrf.mxu0
    %v795 = vpop.f32.mrf.mxu0
    %796 = vdwg.mxu0
    %797 = vmatprep.subr.bf16.mxu0 0
    %798 = vmatpush1.bf16.msra.mxu0 %v604
    %799 = vmatprep.subr.bf16.mxu0 0
    %800 = vmatpush1.bf16.msra.mxu0 %v603
    %801 = vmatprep.subr.bf16.mxu0 0
    %802 = vmatpush1.bf16.msra.mxu0 %v602
    %803 = vmatprep.subr.bf16.mxu0 0
    %804 = vmatpush1.bf16.msra.mxu0 %v601
    %805 = vmatprep.subr.bf16.mxu0 0
    %806 = vmatpush1.bf16.msra.mxu0 %v600
    %807 = vmatprep.subr.bf16.mxu0 0
    %808 = vmatpush1.bf16.msra.mxu0 %v599
    %809 = vmatprep.subr.bf16.mxu0 0
    %810 = vmatpush1.bf16.msra.mxu0 %v598
    %811 = vmatprep.subr.bf16.mxu0 0
    %812 = vmatpush1.bf16.msra.mxu0 %v597
    %813 = vmatprep.subr.bf16.mxu0 0
    %814 = vmatpush2.bf16.msra.mxu0 %v612
    %815 = vmatprep.subr.bf16.mxu0 0
    %816 = vmatpush2.bf16.msra.mxu0 %v611
    %817 = vmatprep.subr.bf16.mxu0 0
    %818 = vmatpush2.bf16.msra.mxu0 %v610
    %819 = vmatprep.subr.bf16.mxu0 0
    %820 = vmatpush2.bf16.msra.mxu0 %v609
    %821 = vmatprep.subr.bf16.mxu0 0
    %822 = vmatpush2.bf16.msra.mxu0 %v608
    %823 = vmatprep.subr.bf16.mxu0 0
    %824 = vmatpush2.bf16.msra.mxu0 %v607
    %825 = vmatprep.subr.bf16.mxu0 0
    %826 = vmatpush2.bf16.msra.mxu0 %v606
    %827 = vmatprep.subr.bf16.mxu0 0
    %828 = vmatpush2.bf16.msra.mxu0 %v605
    %829 = vmatprep.mubr.bf16.mxu0 %v284
    %830 = vmatmul.mubr.bf16.gmra.mxu0 %v282
    %v831 = vpop.f32.mrf.mxu0
    %v832 = vadd.f32 %v792, %v831
    %v833 = vpop.f32.mrf.mxu0
    %v834 = vpop.f32.mrf.mxu0
    %v835 = vpop.f32.mrf.mxu0
    %836 = vdwg.mxu0
    %v837 = vmax.f32 %v832, 0.0
    %v838 = vpack.c.bf16 %v837, %v837
    %v839 = vld [vmem:[%s4] sm:$0xf]
    %v840 = vld [vmem:[%s4 + $0x4] sm:$0xf]
    %v841 = vld [vmem:[%s4 + $0x8] sm:$0xf]
    %v842 = vld [vmem:[%s4 + $0xc] sm:$0xf]
    %v843 = vld [vmem:[%s4 + $0x10] sm:$0xf]
    %v844 = vld [vmem:[%s4 + $0x14] sm:$0xf]
    %v845 = vld [vmem:[%s4 + $0x18] sm:$0xf]
    %v846 = vld [vmem:[%s4 + $0x1c] sm:$0xf]
    %v847 = vld [vmem:[%s4 + $0x20] sm:$0xf]
    %v848 = vld [vmem:[%s4 + $0x24] sm:$0xf]
    %v849 = vld [vmem:[%s4 + $0x28] sm:$0xf]
    %v850 = vld [vmem:[%s4 + $0x2c] sm:$0xf]
    %v851 = vld [vmem:[%s4 + $0x30] sm:$0xf]
    %v852 = vld [vmem:[%s4 + $0x34] sm:$0xf]
    %v853 = vld [vmem:[%s4 + $0x38] sm:$0xf]
    %v854 = vld [vmem:[%s4 + $0x3c] sm:$0xf]
    %v855 = vld [vmem:[%s5] sm:$0x1]
    %v857 = vlaneseq
    %v858 = vshrl.u32 %v857, 7
    %v859 = vsub.s32 0, %v858
    %v860 = vrot.slane %v855, %v859
    %v878 = vunpack.c.l.b16 %v839
    %v879 = vunpack.c.l.b16 %v840
    %v880 = vunpack.c.l.b16 %v841
    %v881 = vunpack.c.l.b16 %v842
    %v882 = vunpack.c.l.b16 %v843
    %v883 = vunpack.c.l.b16 %v844
    %v884 = vunpack.c.l.b16 %v845
    %v885 = vunpack.c.l.b16 %v846
    %v886 = vunpack.c.l.b16 %v847
    %v887 = vunpack.c.l.b16 %v848
    %v888 = vunpack.c.l.b16 %v849
    %v889 = vunpack.c.l.b16 %v850
    %v890 = vunpack.c.l.b16 %v851
    %v891 = vunpack.c.l.b16 %v852
    %v892 = vunpack.c.l.b16 %v853
    %v893 = vunpack.c.l.b16 %v854
    %v894 = vpack.c.b16 %v879, %v878
    %v895 = vpack.c.b16 %v881, %v880
    %v896 = vpack.c.b16 %v883, %v882
    %v897 = vpack.c.b16 %v885, %v884
    %v898 = vpack.c.b16 %v887, %v886
    %v899 = vpack.c.b16 %v889, %v888
    %v900 = vpack.c.b16 %v891, %v890
    %v901 = vpack.c.b16 %v893, %v892
    %910 = vmatprep.subr.bf16.mxu0 0
    %911 = vmatpush1.bf16.msra.mxu0 %v901
    %912 = vmatprep.subr.bf16.mxu0 0
    %913 = vmatpush1.bf16.msra.mxu0 %v900
    %914 = vmatprep.subr.bf16.mxu0 0
    %915 = vmatpush1.bf16.msra.mxu0 %v899
    %916 = vmatprep.subr.bf16.mxu0 0
    %917 = vmatpush1.bf16.msra.mxu0 %v898
    %918 = vmatprep.subr.bf16.mxu0 0
    %919 = vmatpush1.bf16.msra.mxu0 %v897
    %920 = vmatprep.subr.bf16.mxu0 0
    %921 = vmatpush1.bf16.msra.mxu0 %v896
    %922 = vmatprep.subr.bf16.mxu0 0
    %923 = vmatpush1.bf16.msra.mxu0 %v895
    %924 = vmatprep.subr.bf16.mxu0 0
    %925 = vmatpush1.bf16.msra.mxu0 %v894
    %926 = vmatprep.subr.bf16.mxu0 0
    %927 = vmatpush2.bf16.msra.mxu0 0
    %928 = vmatprep.subr.bf16.mxu0 0
    %929 = vmatpush2.bf16.msra.mxu0 0
    %930 = vmatprep.subr.bf16.mxu0 0
    %931 = vmatpush2.bf16.msra.mxu0 0
    %932 = vmatprep.subr.bf16.mxu0 0
    %933 = vmatpush2.bf16.msra.mxu0 0
    %934 = vmatprep.subr.bf16.mxu0 0
    %935 = vmatpush2.bf16.msra.mxu0 0
    %936 = vmatprep.subr.bf16.mxu0 0
    %937 = vmatpush2.bf16.msra.mxu0 0
    %938 = vmatprep.subr.bf16.mxu0 0
    %939 = vmatpush2.bf16.msra.mxu0 0
    %940 = vmatprep.subr.bf16.mxu0 0
    %941 = vmatpush2.bf16.msra.mxu0 0
    %942 = vmatprep.mubr.bf16.mxu0 0
    %943 = vmatmul.mubr.bf16.gmra.mxu0 %v838
    %v944 = vpop.f32.mrf.mxu0
    %v945 = vadd.f32 %v860, %v944
    %v946 = vpop.f32.mrf.mxu0
    %v947 = vpop.f32.mrf.mxu0
    %v948 = vpop.f32.mrf.mxu0
    %949 = vdwg.mxu0
    %950 = vst [vmem:[%s18] sm:$0x3] %v945
    %v951 = vld [vmem:[%s1] sm:$0x3]
    %v952 = vmul.f32 %v945, 0.5
    %v953 = vmul.f32 %v952, 1.442695
    %v954 = vpow.pop %v953
    %956 = vrot.lane.b32.xlu0 %v954, 64
    %v957 = vpop.permute.xlu0 %956
    %v959 = vmul.f32 %v951, %v957
    %v960 = vadd.f32 %v945, %v959
    %v961 = vpack.c.bf16 %v960, %v960
    %v962 = vld [vmem:[%s6] sm:$0xf]
    %v963 = vld [vmem:[%s6 + $0x4] sm:$0xf]
    %v964 = vld [vmem:[%s6 + $0x8] sm:$0xf]
    %v965 = vld [vmem:[%s6 + $0xc] sm:$0xf]
    %v966 = vld [vmem:[%s6 + $0x10] sm:$0xf]
    %v967 = vld [vmem:[%s6 + $0x14] sm:$0xf]
    %v968 = vld [vmem:[%s6 + $0x18] sm:$0xf]
    %v969 = vld [vmem:[%s6 + $0x1c] sm:$0xf]
    %v970 = vld [vmem:[%s7] sm:$0x1]
    %v972 = vlaneseq
    %v973 = vshrl.u32 %v972, 7
    %v974 = vsub.s32 0, %v973
    %v975 = vrot.slane %v970, %v974
    %v985 = vunpack.c.l.b16 %v962
    %v986 = vunpack.c.l.b16 %v963
    %v987 = vunpack.c.l.b16 %v964
    %v988 = vunpack.c.l.b16 %v965
    %v989 = vunpack.c.l.b16 %v966
    %v990 = vunpack.c.l.b16 %v967
    %v991 = vunpack.c.l.b16 %v968
    %v992 = vunpack.c.l.b16 %v969
    %v993 = vpack.c.b16 %v986, %v985
    %v994 = vpack.c.b16 %v988, %v987
    %v995 = vpack.c.b16 %v990, %v989
    %v996 = vpack.c.b16 %v992, %v991
    %vm1001 = vcmask 523264
    %v1003 = vsel %vm1001, %v961, 0
    %1005 = vmatprep.subr.bf16.mxu0 0
    %1006 = vmatpush1.bf16.msra.mxu0 0
    %1007 = vmatprep.subr.bf16.mxu0 0
    %1008 = vmatpush1.bf16.msra.mxu0 0
    %1009 = vmatprep.subr.bf16.mxu0 0
    %1010 = vmatpush1.bf16.msra.mxu0 0
    %1011 = vmatprep.subr.bf16.mxu0 0
    %1012 = vmatpush1.bf16.msra.mxu0 0
    %1013 = vmatprep.subr.bf16.mxu0 0
    %1014 = vmatpush1.bf16.msra.mxu0 %v996
    %1015 = vmatprep.subr.bf16.mxu0 0
    %1016 = vmatpush1.bf16.msra.mxu0 %v995
    %1017 = vmatprep.subr.bf16.mxu0 0
    %1018 = vmatpush1.bf16.msra.mxu0 %v994
    %1019 = vmatprep.subr.bf16.mxu0 0
    %1020 = vmatpush1.bf16.msra.mxu0 %v993
    %1021 = vmatprep.subr.bf16.mxu0 0
    %1022 = vmatpush2.bf16.msra.mxu0 0
    %1023 = vmatprep.subr.bf16.mxu0 0
    %1024 = vmatpush2.bf16.msra.mxu0 0
    %1025 = vmatprep.subr.bf16.mxu0 0
    %1026 = vmatpush2.bf16.msra.mxu0 0
    %1027 = vmatprep.subr.bf16.mxu0 0
    %1028 = vmatpush2.bf16.msra.mxu0 0
    %1029 = vmatprep.subr.bf16.mxu0 0
    %1030 = vmatpush2.bf16.msra.mxu0 0
    %1031 = vmatprep.subr.bf16.mxu0 0
    %1032 = vmatpush2.bf16.msra.mxu0 0
    %1033 = vmatprep.subr.bf16.mxu0 0
    %1034 = vmatpush2.bf16.msra.mxu0 0
    %1035 = vmatprep.subr.bf16.mxu0 0
    %1036 = vmatpush2.bf16.msra.mxu0 0
    %1037 = vmatprep.mubr.bf16.mxu0 0
    %1038 = vmatmul.mubr.bf16.gmra.mxu0 %v1003
    %v1039 = vpop.f32.mrf.mxu0
    %v1040 = vadd.f32 %v975, %v1039
    %v1041 = vpop.f32.mrf.mxu0
    %v1042 = vpop.f32.mrf.mxu0
    %v1043 = vpop.f32.mrf.mxu0
    %1044 = vdwg.mxu0
    %v1045 = vmax.f32 %v1040, 0.0
    %v1046 = vpack.c.bf16 %v1045, %v1045
    %v1047 = vld [vmem:[#allocation4] sm:$0xff]
    %v1048 = vld [vmem:[#allocation4 + $0x8] sm:$0xff]
    %v1049 = vld [vmem:[#allocation4 + $0x10] sm:$0xff]
    %v1050 = vld [vmem:[#allocation4 + $0x18] sm:$0xff]
    %v1051 = vld [vmem:[#allocation4 + $0x20] sm:$0xff]
    %v1052 = vld [vmem:[#allocation4 + $0x28] sm:$0xff]
    %v1053 = vld [vmem:[#allocation4 + $0x30] sm:$0xff]
    %v1054 = vld [vmem:[#allocation4 + $0x38] sm:$0xff]
    %v1055 = vld [vmem:[#allocation4 + $0x40] sm:$0xff]
    %v1056 = vld [vmem:[#allocation4 + $0x48] sm:$0xff]
    %v1057 = vld [vmem:[#allocation4 + $0x50] sm:$0xff]
    %v1058 = vld [vmem:[#allocation4 + $0x58] sm:$0xff]
    %v1059 = vld [vmem:[#allocation4 + $0x60] sm:$0xff]
    %v1060 = vld [vmem:[#allocation4 + $0x68] sm:$0xff]
    %v1061 = vld [vmem:[#allocation4 + $0x70] sm:$0xff]
    %v1062 = vld [vmem:[#allocation4 + $0x78] sm:$0xff]
    %v1063 = vld [vmem:[#allocation4 + $0x80] sm:$0xff]
    %v1064 = vld [vmem:[#allocation4 + $0x88] sm:$0xff]
    %v1065 = vld [vmem:[#allocation4 + $0x90] sm:$0xff]
    %v1066 = vld [vmem:[#allocation4 + $0x98] sm:$0xff]
    %v1067 = vld [vmem:[#allocation4 + $0xa0] sm:$0xff]
    %v1068 = vld [vmem:[#allocation4 + $0xa8] sm:$0xff]
    %v1069 = vld [vmem:[#allocation4 + $0xb0] sm:$0xff]
    %v1070 = vld [vmem:[#allocation4 + $0xb8] sm:$0xff]
    %v1071 = vld [vmem:[#allocation4 + $0xc0] sm:$0xff]
    %v1072 = vld [vmem:[#allocation4 + $0xc8] sm:$0xff]
    %v1073 = vld [vmem:[#allocation4 + $0xd0] sm:$0xff]
    %v1074 = vld [vmem:[#allocation4 + $0xd8] sm:$0xff]
    %v1075 = vld [vmem:[#allocation4 + $0xe0] sm:$0xff]
    %v1076 = vld [vmem:[#allocation4 + $0xe8] sm:$0xff]
    %v1077 = vld [vmem:[#allocation4 + $0xf0] sm:$0xff]
    %v1078 = vld [vmem:[#allocation4 + $0xf8] sm:$0xff]
    %v1079 = vld [vmem:[#allocation4 + $0x100] sm:$0xff]
    %v1080 = vld [vmem:[#allocation4 + $0x108] sm:$0xff]
    %v1081 = vld [vmem:[#allocation4 + $0x110] sm:$0xff]
    %v1082 = vld [vmem:[#allocation4 + $0x118] sm:$0xff]
    %v1083 = vld [vmem:[#allocation4 + $0x120] sm:$0xff]
    %v1084 = vld [vmem:[#allocation4 + $0x128] sm:$0xff]
    %v1085 = vld [vmem:[#allocation4 + $0x130] sm:$0xff]
    %v1086 = vld [vmem:[#allocation4 + $0x138] sm:$0xff]
    %v1087 = vld [vmem:[#allocation4 + $0x140] sm:$0xff]
    %v1088 = vld [vmem:[#allocation4 + $0x148] sm:$0xff]
    %v1089 = vld [vmem:[#allocation4 + $0x150] sm:$0xff]
    %v1090 = vld [vmem:[#allocation4 + $0x158] sm:$0xff]
    %v1091 = vld [vmem:[#allocation4 + $0x160] sm:$0xff]
    %v1092 = vld [vmem:[#allocation4 + $0x168] sm:$0xff]
    %v1093 = vld [vmem:[#allocation4 + $0x170] sm:$0xff]
    %v1094 = vld [vmem:[#allocation4 + $0x178] sm:$0xff]
    %v1095 = vld [vmem:[#allocation4 + $0x180] sm:$0xff]
    %v1096 = vld [vmem:[#allocation4 + $0x188] sm:$0xff]
    %v1097 = vld [vmem:[#allocation4 + $0x190] sm:$0xff]
    %v1098 = vld [vmem:[#allocation4 + $0x198] sm:$0xff]
    %v1099 = vld [vmem:[#allocation4 + $0x1a0] sm:$0xff]
    %v1100 = vld [vmem:[#allocation4 + $0x1a8] sm:$0xff]
    %v1101 = vld [vmem:[#allocation4 + $0x1b0] sm:$0xff]
    %v1102 = vld [vmem:[#allocation4 + $0x1b8] sm:$0xff]
    %v1103 = vld [vmem:[#allocation4 + $0x1c0] sm:$0xff]
    %v1104 = vld [vmem:[#allocation4 + $0x1c8] sm:$0xff]
    %v1105 = vld [vmem:[#allocation4 + $0x1d0] sm:$0xff]
    %v1106 = vld [vmem:[#allocation4 + $0x1d8] sm:$0xff]
    %v1107 = vld [vmem:[#allocation4 + $0x1e0] sm:$0xff]
    %v1108 = vld [vmem:[#allocation4 + $0x1e8] sm:$0xff]
    %v1109 = vld [vmem:[#allocation4 + $0x1f0] sm:$0xff]
    %v1110 = vld [vmem:[#allocation4 + $0x1f8] sm:$0xff]
    %v1111 = vld [vmem:[%s9] sm:$0xff]
    %v1113 = vlaneseq
    %v1114 = vshrl.u32 %v1113, 7
    %v1115 = vsub.s32 0, %v1114
    %v1116 = vrot.slane %v1111, %v1115
    %v1117 = vlaneseq
    %v1118 = vshrl.u32 %v1117, 7
    %v1119 = vsub.s32 1, %v1118
    %v1120 = vrot.slane %v1111, %v1119
    %v1121 = vlaneseq
    %v1122 = vshrl.u32 %v1121, 7
    %v1123 = vsub.s32 2, %v1122
    %v1124 = vrot.slane %v1111, %v1123
    %v1125 = vlaneseq
    %v1126 = vshrl.u32 %v1125, 7
    %v1127 = vsub.s32 3, %v1126
    %v1128 = vrot.slane %v1111, %v1127
    %v1129 = vlaneseq
    %v1130 = vshrl.u32 %v1129, 7
    %v1131 = vsub.s32 4, %v1130
    %v1132 = vrot.slane %v1111, %v1131
    %v1133 = vlaneseq
    %v1134 = vshrl.u32 %v1133, 7
    %v1135 = vsub.s32 5, %v1134
    %v1136 = vrot.slane %v1111, %v1135
    %v1137 = vlaneseq
    %v1138 = vshrl.u32 %v1137, 7
    %v1139 = vsub.s32 6, %v1138
    %v1140 = vrot.slane %v1111, %v1139
    %v1141 = vlaneseq
    %v1142 = vshrl.u32 %v1141, 7
    %v1143 = vsub.s32 7, %v1142
    %v1144 = vrot.slane %v1111, %v1143
    %v1217 = vunpack.c.l.b16 %v1047
    %v1218 = vunpack.c.h.b16 %v1047
    %v1219 = vunpack.c.l.b16 %v1048
    %v1220 = vunpack.c.h.b16 %v1048
    %v1221 = vunpack.c.l.b16 %v1049
    %v1222 = vunpack.c.h.b16 %v1049
    %v1223 = vunpack.c.l.b16 %v1050
    %v1224 = vunpack.c.h.b16 %v1050
    %v1225 = vunpack.c.l.b16 %v1051
    %v1226 = vunpack.c.h.b16 %v1051
    %v1227 = vunpack.c.l.b16 %v1052
    %v1228 = vunpack.c.h.b16 %v1052
    %v1229 = vunpack.c.l.b16 %v1053
    %v1230 = vunpack.c.h.b16 %v1053
    %v1231 = vunpack.c.l.b16 %v1054
    %v1232 = vunpack.c.h.b16 %v1054
    %v1233 = vunpack.c.l.b16 %v1055
    %v1234 = vunpack.c.h.b16 %v1055
    %v1235 = vunpack.c.l.b16 %v1056
    %v1236 = vunpack.c.h.b16 %v1056
    %v1237 = vunpack.c.l.b16 %v1057
    %v1238 = vunpack.c.h.b16 %v1057
    %v1239 = vunpack.c.l.b16 %v1058
    %v1240 = vunpack.c.h.b16 %v1058
    %v1241 = vunpack.c.l.b16 %v1059
    %v1242 = vunpack.c.h.b16 %v1059
    %v1243 = vunpack.c.l.b16 %v1060
    %v1244 = vunpack.c.h.b16 %v1060
    %v1245 = vunpack.c.l.b16 %v1061
    %v1246 = vunpack.c.h.b16 %v1061
    %v1247 = vunpack.c.l.b16 %v1062
    %v1248 = vunpack.c.h.b16 %v1062
    %v1249 = vunpack.c.l.b16 %v1063
    %v1250 = vunpack.c.h.b16 %v1063
    %v1251 = vunpack.c.l.b16 %v1064
    %v1252 = vunpack.c.h.b16 %v1064
    %v1253 = vunpack.c.l.b16 %v1065
    %v1254 = vunpack.c.h.b16 %v1065
    %v1255 = vunpack.c.l.b16 %v1066
    %v1256 = vunpack.c.h.b16 %v1066
    %v1257 = vunpack.c.l.b16 %v1067
    %v1258 = vunpack.c.h.b16 %v1067
    %v1259 = vunpack.c.l.b16 %v1068
    %v1260 = vunpack.c.h.b16 %v1068
    %v1261 = vunpack.c.l.b16 %v1069
    %v1262 = vunpack.c.h.b16 %v1069
    %v1263 = vunpack.c.l.b16 %v1070
    %v1264 = vunpack.c.h.b16 %v1070
    %v1265 = vunpack.c.l.b16 %v1071
    %v1266 = vunpack.c.h.b16 %v1071
    %v1267 = vunpack.c.l.b16 %v1072
    %v1268 = vunpack.c.h.b16 %v1072
    %v1269 = vunpack.c.l.b16 %v1073
    %v1270 = vunpack.c.h.b16 %v1073
    %v1271 = vunpack.c.l.b16 %v1074
    %v1272 = vunpack.c.h.b16 %v1074
    %v1273 = vunpack.c.l.b16 %v1075
    %v1274 = vunpack.c.h.b16 %v1075
    %v1275 = vunpack.c.l.b16 %v1076
    %v1276 = vunpack.c.h.b16 %v1076
    %v1277 = vunpack.c.l.b16 %v1077
    %v1278 = vunpack.c.h.b16 %v1077
    %v1279 = vunpack.c.l.b16 %v1078
    %v1280 = vunpack.c.h.b16 %v1078
    %v1281 = vunpack.c.l.b16 %v1079
    %v1282 = vunpack.c.h.b16 %v1079
    %v1283 = vunpack.c.l.b16 %v1080
    %v1284 = vunpack.c.h.b16 %v1080
    %v1285 = vunpack.c.l.b16 %v1081
    %v1286 = vunpack.c.h.b16 %v1081
    %v1287 = vunpack.c.l.b16 %v1082
    %v1288 = vunpack.c.h.b16 %v1082
    %v1289 = vunpack.c.l.b16 %v1083
    %v1290 = vunpack.c.h.b16 %v1083
    %v1291 = vunpack.c.l.b16 %v1084
    %v1292 = vunpack.c.h.b16 %v1084
    %v1293 = vunpack.c.l.b16 %v1085
    %v1294 = vunpack.c.h.b16 %v1085
    %v1295 = vunpack.c.l.b16 %v1086
    %v1296 = vunpack.c.h.b16 %v1086
    %v1297 = vunpack.c.l.b16 %v1087
    %v1298 = vunpack.c.h.b16 %v1087
    %v1299 = vunpack.c.l.b16 %v1088
    %v1300 = vunpack.c.h.b16 %v1088
    %v1301 = vunpack.c.l.b16 %v1089
    %v1302 = vunpack.c.h.b16 %v1089
    %v1303 = vunpack.c.l.b16 %v1090
    %v1304 = vunpack.c.h.b16 %v1090
    %v1305 = vunpack.c.l.b16 %v1091
    %v1306 = vunpack.c.h.b16 %v1091
    %v1307 = vunpack.c.l.b16 %v1092
    %v1308 = vunpack.c.h.b16 %v1092
    %v1309 = vunpack.c.l.b16 %v1093
    %v1310 = vunpack.c.h.b16 %v1093
    %v1311 = vunpack.c.l.b16 %v1094
    %v1312 = vunpack.c.h.b16 %v1094
    %v1313 = vunpack.c.l.b16 %v1095
    %v1314 = vunpack.c.h.b16 %v1095
    %v1315 = vunpack.c.l.b16 %v1096
    %v1316 = vunpack.c.h.b16 %v1096
    %v1317 = vunpack.c.l.b16 %v1097
    %v1318 = vunpack.c.h.b16 %v1097
    %v1319 = vunpack.c.l.b16 %v1098
    %v1320 = vunpack.c.h.b16 %v1098
    %v1321 = vunpack.c.l.b16 %v1099
    %v1322 = vunpack.c.h.b16 %v1099
    %v1323 = vunpack.c.l.b16 %v1100
    %v1324 = vunpack.c.h.b16 %v1100
    %v1325 = vunpack.c.l.b16 %v1101
    %v1326 = vunpack.c.h.b16 %v1101
    %v1327 = vunpack.c.l.b16 %v1102
    %v1328 = vunpack.c.h.b16 %v1102
    %v1329 = vunpack.c.l.b16 %v1103
    %v1330 = vunpack.c.h.b16 %v1103
    %v1331 = vunpack.c.l.b16 %v1104
    %v1332 = vunpack.c.h.b16 %v1104
    %v1333 = vunpack.c.l.b16 %v1105
    %v1334 = vunpack.c.h.b16 %v1105
    %v1335 = vunpack.c.l.b16 %v1106
    %v1336 = vunpack.c.h.b16 %v1106
    %v1337 = vunpack.c.l.b16 %v1107
    %v1338 = vunpack.c.h.b16 %v1107
    %v1339 = vunpack.c.l.b16 %v1108
    %v1340 = vunpack.c.h.b16 %v1108
    %v1341 = vunpack.c.l.b16 %v1109
    %v1342 = vunpack.c.h.b16 %v1109
    %v1343 = vunpack.c.l.b16 %v1110
    %v1344 = vunpack.c.h.b16 %v1110
    %v1345 = vpack.c.b16 %v1225, %v1217
    %v1346 = vpack.c.b16 %v1226, %v1218
    %v1347 = vpack.c.b16 %v1227, %v1219
    %v1348 = vpack.c.b16 %v1228, %v1220
    %v1349 = vpack.c.b16 %v1229, %v1221
    %v1350 = vpack.c.b16 %v1230, %v1222
    %v1351 = vpack.c.b16 %v1231, %v1223
    %v1352 = vpack.c.b16 %v1232, %v1224
    %v1353 = vpack.c.b16 %v1241, %v1233
    %v1354 = vpack.c.b16 %v1242, %v1234
    %v1355 = vpack.c.b16 %v1243, %v1235
    %v1356 = vpack.c.b16 %v1244, %v1236
    %v1357 = vpack.c.b16 %v1245, %v1237
    %v1358 = vpack.c.b16 %v1246, %v1238
    %v1359 = vpack.c.b16 %v1247, %v1239
    %v1360 = vpack.c.b16 %v1248, %v1240
    %v1361 = vpack.c.b16 %v1257, %v1249
    %v1362 = vpack.c.b16 %v1258, %v1250
    %v1363 = vpack.c.b16 %v1259, %v1251
    %v1364 = vpack.c.b16 %v1260, %v1252
    %v1365 = vpack.c.b16 %v1261, %v1253
    %v1366 = vpack.c.b16 %v1262, %v1254
    %v1367 = vpack.c.b16 %v1263, %v1255
    %v1368 = vpack.c.b16 %v1264, %v1256
    %v1369 = vpack.c.b16 %v1273, %v1265
    %v1370 = vpack.c.b16 %v1274, %v1266
    %v1371 = vpack.c.b16 %v1275, %v1267
    %v1372 = vpack.c.b16 %v1276, %v1268
    %v1373 = vpack.c.b16 %v1277, %v1269
    %v1374 = vpack.c.b16 %v1278, %v1270
    %v1375 = vpack.c.b16 %v1279, %v1271
    %v1376 = vpack.c.b16 %v1280, %v1272
    %v1377 = vpack.c.b16 %v1289, %v1281
    %v1378 = vpack.c.b16 %v1290, %v1282
    %v1379 = vpack.c.b16 %v1291, %v1283
    %v1380 = vpack.c.b16 %v1292, %v1284
    %v1381 = vpack.c.b16 %v1293, %v1285
    %v1382 = vpack.c.b16 %v1294, %v1286
    %v1383 = vpack.c.b16 %v1295, %v1287
    %v1384 = vpack.c.b16 %v1296, %v1288
    %v1385 = vpack.c.b16 %v1305, %v1297
    %v1386 = vpack.c.b16 %v1306, %v1298
    %v1387 = vpack.c.b16 %v1307, %v1299
    %v1388 = vpack.c.b16 %v1308, %v1300
    %v1389 = vpack.c.b16 %v1309, %v1301
    %v1390 = vpack.c.b16 %v1310, %v1302
    %v1391 = vpack.c.b16 %v1311, %v1303
    %v1392 = vpack.c.b16 %v1312, %v1304
    %v1393 = vpack.c.b16 %v1321, %v1313
    %v1394 = vpack.c.b16 %v1322, %v1314
    %v1395 = vpack.c.b16 %v1323, %v1315
    %v1396 = vpack.c.b16 %v1324, %v1316
    %v1397 = vpack.c.b16 %v1325, %v1317
    %v1398 = vpack.c.b16 %v1326, %v1318
    %v1399 = vpack.c.b16 %v1327, %v1319
    %v1400 = vpack.c.b16 %v1328, %v1320
    %v1401 = vpack.c.b16 %v1337, %v1329
    %v1402 = vpack.c.b16 %v1338, %v1330
    %v1403 = vpack.c.b16 %v1339, %v1331
    %v1404 = vpack.c.b16 %v1340, %v1332
    %v1405 = vpack.c.b16 %v1341, %v1333
    %v1406 = vpack.c.b16 %v1342, %v1334
    %v1407 = vpack.c.b16 %v1343, %v1335
    %v1408 = vpack.c.b16 %v1344, %v1336
    %1473 = vmatprep.subr.bf16.mxu0 %v1402
    %1474 = vmatpush1.bf16.msra.mxu0 %v1401
    %1475 = vmatprep.subr.bf16.mxu0 %v1394
    %1476 = vmatpush1.bf16.msra.mxu0 %v1393
    %1477 = vmatprep.subr.bf16.mxu0 %v1386
    %1478 = vmatpush1.bf16.msra.mxu0 %v1385
    %1479 = vmatprep.subr.bf16.mxu0 %v1378
    %1480 = vmatpush1.bf16.msra.mxu0 %v1377
    %1481 = vmatprep.subr.bf16.mxu0 %v1370
    %1482 = vmatpush1.bf16.msra.mxu0 %v1369
    %1483 = vmatprep.subr.bf16.mxu0 %v1362
    %1484 = vmatpush1.bf16.msra.mxu0 %v1361
    %1485 = vmatprep.subr.bf16.mxu0 %v1354
    %1486 = vmatpush1.bf16.msra.mxu0 %v1353
    %1487 = vmatprep.subr.bf16.mxu0 %v1346
    %1488 = vmatpush1.bf16.msra.mxu0 %v1345
    %1489 = vmatprep.subr.bf16.mxu0 0
    %1490 = vmatpush2.bf16.msra.mxu0 0
    %1491 = vmatprep.subr.bf16.mxu0 0
    %1492 = vmatpush2.bf16.msra.mxu0 0
    %1493 = vmatprep.subr.bf16.mxu0 0
    %1494 = vmatpush2.bf16.msra.mxu0 0
    %1495 = vmatprep.subr.bf16.mxu0 0
    %1496 = vmatpush2.bf16.msra.mxu0 0
    %1497 = vmatprep.subr.bf16.mxu0 0
    %1498 = vmatpush2.bf16.msra.mxu0 0
    %1499 = vmatprep.subr.bf16.mxu0 0
    %1500 = vmatpush2.bf16.msra.mxu0 0
    %1501 = vmatprep.subr.bf16.mxu0 0
    %1502 = vmatpush2.bf16.msra.mxu0 0
    %1503 = vmatprep.subr.bf16.mxu0 0
    %1504 = vmatpush2.bf16.msra.mxu0 0
    %1505 = vmatprep.mubr.bf16.mxu0 0
    %1506 = vmatmul.mubr.bf16.gmra.mxu0 %v1046
    %v1507 = vpop.f32.mrf.mxu0
    %v1508 = vadd.f32 %v1116, %v1507
    %v1509 = vpop.f32.mrf.mxu0
    %v1510 = vadd.f32 %v1120, %v1509
    %v1511 = vpop.f32.mrf.mxu0
    %v1512 = vpop.f32.mrf.mxu0
    %1513 = vdwg.mxu0
    %1514 = vmatprep.subr.bf16.mxu0 %v1404
    %1515 = vmatpush1.bf16.msra.mxu0 %v1403
    %1516 = vmatprep.subr.bf16.mxu0 %v1396
    %1517 = vmatpush1.bf16.msra.mxu0 %v1395
    %1518 = vmatprep.subr.bf16.mxu0 %v1388
    %1519 = vmatpush1.bf16.msra.mxu0 %v1387
    %1520 = vmatprep.subr.bf16.mxu0 %v1380
    %1521 = vmatpush1.bf16.msra.mxu0 %v1379
    %1522 = vmatprep.subr.bf16.mxu0 %v1372
    %1523 = vmatpush1.bf16.msra.mxu0 %v1371
    %1524 = vmatprep.subr.bf16.mxu0 %v1364
    %1525 = vmatpush1.bf16.msra.mxu0 %v1363
    %1526 = vmatprep.subr.bf16.mxu0 %v1356
    %1527 = vmatpush1.bf16.msra.mxu0 %v1355
    %1528 = vmatprep.subr.bf16.mxu0 %v1348
    %1529 = vmatpush1.bf16.msra.mxu0 %v1347
    %1530 = vmatprep.subr.bf16.mxu0 0
    %1531 = vmatpush2.bf16.msra.mxu0 0
    %1532 = vmatprep.subr.bf16.mxu0 0
    %1533 = vmatpush2.bf16.msra.mxu0 0
    %1534 = vmatprep.subr.bf16.mxu0 0
    %1535 = vmatpush2.bf16.msra.mxu0 0
    %1536 = vmatprep.subr.bf16.mxu0 0
    %1537 = vmatpush2.bf16.msra.mxu0 0
    %1538 = vmatprep.subr.bf16.mxu0 0
    %1539 = vmatpush2.bf16.msra.mxu0 0
    %1540 = vmatprep.subr.bf16.mxu0 0
    %1541 = vmatpush2.bf16.msra.mxu0 0
    %1542 = vmatprep.subr.bf16.mxu0 0
    %1543 = vmatpush2.bf16.msra.mxu0 0
    %1544 = vmatprep.subr.bf16.mxu0 0
    %1545 = vmatpush2.bf16.msra.mxu0 0
    %1546 = vmatprep.mubr.bf16.mxu0 0
    %1547 = vmatmul.mubr.bf16.gmra.mxu0 %v1046
    %v1548 = vpop.f32.mrf.mxu0
    %v1549 = vadd.f32 %v1124, %v1548
    %v1550 = vpop.f32.mrf.mxu0
    %v1551 = vadd.f32 %v1128, %v1550
    %v1552 = vpop.f32.mrf.mxu0
    %v1553 = vpop.f32.mrf.mxu0
    %1554 = vdwg.mxu0
    %1555 = vmatprep.subr.bf16.mxu0 %v1406
    %1556 = vmatpush1.bf16.msra.mxu0 %v1405
    %1557 = vmatprep.subr.bf16.mxu0 %v1398
    %1558 = vmatpush1.bf16.msra.mxu0 %v1397
    %1559 = vmatprep.subr.bf16.mxu0 %v1390
    %1560 = vmatpush1.bf16.msra.mxu0 %v1389
    %1561 = vmatprep.subr.bf16.mxu0 %v1382
    %1562 = vmatpush1.bf16.msra.mxu0 %v1381
    %1563 = vmatprep.subr.bf16.mxu0 %v1374
    %1564 = vmatpush1.bf16.msra.mxu0 %v1373
    %1565 = vmatprep.subr.bf16.mxu0 %v1366
    %1566 = vmatpush1.bf16.msra.mxu0 %v1365
    %1567 = vmatprep.subr.bf16.mxu0 %v1358
    %1568 = vmatpush1.bf16.msra.mxu0 %v1357
    %1569 = vmatprep.subr.bf16.mxu0 %v1350
    %1570 = vmatpush1.bf16.msra.mxu0 %v1349
    %1571 = vmatprep.subr.bf16.mxu0 0
    %1572 = vmatpush2.bf16.msra.mxu0 0
    %1573 = vmatprep.subr.bf16.mxu0 0
    %1574 = vmatpush2.bf16.msra.mxu0 0
    %1575 = vmatprep.subr.bf16.mxu0 0
    %1576 = vmatpush2.bf16.msra.mxu0 0
    %1577 = vmatprep.subr.bf16.mxu0 0
    %1578 = vmatpush2.bf16.msra.mxu0 0
    %1579 = vmatprep.subr.bf16.mxu0 0
    %1580 = vmatpush2.bf16.msra.mxu0 0
    %1581 = vmatprep.subr.bf16.mxu0 0
    %1582 = vmatpush2.bf16.msra.mxu0 0
    %1583 = vmatprep.subr.bf16.mxu0 0
    %1584 = vmatpush2.bf16.msra.mxu0 0
    %1585 = vmatprep.subr.bf16.mxu0 0
    %1586 = vmatpush2.bf16.msra.mxu0 0
    %1587 = vmatprep.mubr.bf16.mxu0 0
    %1588 = vmatmul.mubr.bf16.gmra.mxu0 %v1046
    %v1589 = vpop.f32.mrf.mxu0
    %v1590 = vadd.f32 %v1132, %v1589
    %v1591 = vpop.f32.mrf.mxu0
    %v1592 = vadd.f32 %v1136, %v1591
    %v1593 = vpop.f32.mrf.mxu0
    %v1594 = vpop.f32.mrf.mxu0
    %1595 = vdwg.mxu0
    %1596 = vmatprep.subr.bf16.mxu0 %v1408
    %1597 = vmatpush1.bf16.msra.mxu0 %v1407
    %1598 = vmatprep.subr.bf16.mxu0 %v1400
    %1599 = vmatpush1.bf16.msra.mxu0 %v1399
    %1600 = vmatprep.subr.bf16.mxu0 %v1392
    %1601 = vmatpush1.bf16.msra.mxu0 %v1391
    %1602 = vmatprep.subr.bf16.mxu0 %v1384
    %1603 = vmatpush1.bf16.msra.mxu0 %v1383
    %1604 = vmatprep.subr.bf16.mxu0 %v1376
    %1605 = vmatpush1.bf16.msra.mxu0 %v1375
    %1606 = vmatprep.subr.bf16.mxu0 %v1368
    %1607 = vmatpush1.bf16.msra.mxu0 %v1367
    %1608 = vmatprep.subr.bf16.mxu0 %v1360
    %1609 = vmatpush1.bf16.msra.mxu0 %v1359
    %1610 = vmatprep.subr.bf16.mxu0 %v1352
    %1611 = vmatpush1.bf16.msra.mxu0 %v1351
    %1612 = vmatprep.subr.bf16.mxu0 0
    %1613 = vmatpush2.bf16.msra.mxu0 0
    %1614 = vmatprep.subr.bf16.mxu0 0
    %1615 = vmatpush2.bf16.msra.mxu0 0
    %1616 = vmatprep.subr.bf16.mxu0 0
    %1617 = vmatpush2.bf16.msra.mxu0 0
    %1618 = vmatprep.subr.bf16.mxu0 0
    %1619 = vmatpush2.bf16.msra.mxu0 0
    %1620 = vmatprep.subr.bf16.mxu0 0
    %1621 = vmatpush2.bf16.msra.mxu0 0
    %1622 = vmatprep.subr.bf16.mxu0 0
    %1623 = vmatpush2.bf16.msra.mxu0 0
    %1624 = vmatprep.subr.bf16.mxu0 0
    %1625 = vmatpush2.bf16.msra.mxu0 0
    %1626 = vmatprep.subr.bf16.mxu0 0
    %1627 = vmatpush2.bf16.msra.mxu0 0
    %1628 = vmatprep.mubr.bf16.mxu0 0
    %1629 = vmatmul.mubr.bf16.gmra.mxu0 %v1046
    %v1630 = vpop.f32.mrf.mxu0
    %v1631 = vadd.f32 %v1140, %v1630
    %v1632 = vpop.f32.mrf.mxu0
    %v1633 = vadd.f32 %v1144, %v1632
    %v1634 = vpop.f32.mrf.mxu0
    %v1635 = vpop.f32.mrf.mxu0
    %1636 = vdwg.mxu0
    %v1637 = vxor.u32 %v1508, 2147483648
    %v1638 = vxor.u32 %v1510, 2147483648
    %v1639 = vxor.u32 %v1549, 2147483648
    %v1640 = vxor.u32 %v1551, 2147483648
    %v1641 = vxor.u32 %v1590, 2147483648
    %v1642 = vxor.u32 %v1592, 2147483648
    %v1643 = vxor.u32 %v1631, 2147483648
    %v1644 = vxor.u32 %v1633, 2147483648
    %v1645 = vmul.f32 %v1637, 1.442695
    %v1646 = vpow.pop %v1645
    %v1647 = vmul.f32 %v1638, 1.442695
    %v1648 = vpow.pop %v1647
    %v1649 = vmul.f32 %v1639, 1.442695
    %v1650 = vpow.pop %v1649
    %v1651 = vmul.f32 %v1640, 1.442695
    %v1652 = vpow.pop %v1651
    %v1653 = vmul.f32 %v1641, 1.442695
    %v1654 = vpow.pop %v1653
    %v1655 = vmul.f32 %v1642, 1.442695
    %v1656 = vpow.pop %v1655
    %v1657 = vmul.f32 %v1643, 1.442695
    %v1658 = vpow.pop %v1657
    %v1659 = vmul.f32 %v1644, 1.442695
    %v1660 = vpow.pop %v1659
    %v1661 = vadd.f32 %v1646, 1.0
    %v1662 = vadd.f32 %v1648, 1.0
    %v1663 = vadd.f32 %v1650, 1.0
    %v1664 = vadd.f32 %v1652, 1.0
    %v1665 = vadd.f32 %v1654, 1.0
    %v1666 = vadd.f32 %v1656, 1.0
    %v1667 = vadd.f32 %v1658, 1.0
    %v1668 = vadd.f32 %v1660, 1.0
    %v1669 = vrcp.pop %v1661
    %v1670 = vmul.f32 1.0, %v1669
    %v1671 = vrcp.pop %v1662
    %v1672 = vmul.f32 1.0, %v1671
    %v1673 = vrcp.pop %v1663
    %v1674 = vmul.f32 1.0, %v1673
    %v1675 = vrcp.pop %v1664
    %v1676 = vmul.f32 1.0, %v1675
    %v1677 = vrcp.pop %v1665
    %v1678 = vmul.f32 1.0, %v1677
    %v1679 = vrcp.pop %v1666
    %v1680 = vmul.f32 1.0, %v1679
    %v1681 = vrcp.pop %v1667
    %v1682 = vmul.f32 1.0, %v1681
    %v1683 = vrcp.pop %v1668
    %v1684 = vmul.f32 1.0, %v1683
    %v1693 = vcombine.low %v1670, %v1672
    %v1694 = vcombine.low %v1674, %v1676
    %v1696 = vunpack.c.l.s4 1983009808
    %v1697 = vunpack.c.0.s8 %v1696
    %v1698 = vlaneseq
    %v1699 = vshrl.u32 %v1698, 7
    %v1700 = vsub.s32 %v1697, %v1699
    %v1701 = vrot.slane %v1693, %v1700
    %v1703 = vunpack.c.l.s4 1983009808
    %v1704 = vunpack.c.0.s8 %v1703
    %v1705 = vlaneseq
    %v1706 = vshrl.u32 %v1705, 7
    %v1707 = vsub.s32 %v1704, %v1706
    %v1708 = vrot.slane %v1694, %v1707
    %v1709 = vcombine.low %v1701, %v1708
    %v1710 = vcombine.low %v1678, %v1680
    %v1711 = vcombine.low %v1682, %v1684
    %v1713 = vunpack.c.l.s4 1983009808
    %v1714 = vunpack.c.0.s8 %v1713
    %v1715 = vlaneseq
    %v1716 = vshrl.u32 %v1715, 7
    %v1717 = vsub.s32 %v1714, %v1716
    %v1718 = vrot.slane %v1710, %v1717
    %v1720 = vunpack.c.l.s4 1983009808
    %v1721 = vunpack.c.0.s8 %v1720
    %v1722 = vlaneseq
    %v1723 = vshrl.u32 %v1722, 7
    %v1724 = vsub.s32 %v1721, %v1723
    %v1725 = vrot.slane %v1711, %v1724
    %v1726 = vcombine.low %v1718, %v1725
    %1729 = vst [vmem:[%s16] sm:$0xff] %v1709
    %1730 = vst [vmem:[%s16 + $0x8] sm:$0xff] %v1726
    %v1731 = vld [vmem:[%s10] sm:$0xf]
    %v1732 = vld [vmem:[%s10 + $0x4] sm:$0xf]
    %v1733 = vld [vmem:[%s10 + $0x8] sm:$0xf]
    %v1734 = vld [vmem:[%s10 + $0xc] sm:$0xf]
    %v1735 = vld [vmem:[%s10 + $0x10] sm:$0xf]
    %v1736 = vld [vmem:[%s10 + $0x14] sm:$0xf]
    %v1737 = vld [vmem:[%s10 + $0x18] sm:$0xf]
    %v1738 = vld [vmem:[%s10 + $0x1c] sm:$0xf]
    %v1739 = vld [vmem:[%s11] sm:$0x1]
    %v1741 = vlaneseq
    %v1742 = vshrl.u32 %v1741, 7
    %v1743 = vsub.s32 0, %v1742
    %v1744 = vrot.slane %v1739, %v1743
    %v1754 = vunpack.c.l.b16 %v1731
    %v1755 = vunpack.c.l.b16 %v1732
    %v1756 = vunpack.c.l.b16 %v1733
    %v1757 = vunpack.c.l.b16 %v1734
    %v1758 = vunpack.c.l.b16 %v1735
    %v1759 = vunpack.c.l.b16 %v1736
    %v1760 = vunpack.c.l.b16 %v1737
    %v1761 = vunpack.c.l.b16 %v1738
    %v1762 = vpack.c.b16 %v1755, %v1754
    %v1763 = vpack.c.b16 %v1757, %v1756
    %v1764 = vpack.c.b16 %v1759, %v1758
    %v1765 = vpack.c.b16 %v1761, %v1760
    %1770 = vmatprep.subr.bf16.mxu0 0
    %1771 = vmatpush1.bf16.msra.mxu0 0
    %1772 = vmatprep.subr.bf16.mxu0 0
    %1773 = vmatpush1.bf16.msra.mxu0 0
    %1774 = vmatprep.subr.bf16.mxu0 0
    %1775 = vmatpush1.bf16.msra.mxu0 0
    %1776 = vmatprep.subr.bf16.mxu0 0
    %1777 = vmatpush1.bf16.msra.mxu0 0
    %1778 = vmatprep.subr.bf16.mxu0 0
    %1779 = vmatpush1.bf16.msra.mxu0 %v1765
    %1780 = vmatprep.subr.bf16.mxu0 0
    %1781 = vmatpush1.bf16.msra.mxu0 %v1764
    %1782 = vmatprep.subr.bf16.mxu0 0
    %1783 = vmatpush1.bf16.msra.mxu0 %v1763
    %1784 = vmatprep.subr.bf16.mxu0 0
    %1785 = vmatpush1.bf16.msra.mxu0 %v1762
    %1786 = vmatprep.subr.bf16.mxu0 0
    %1787 = vmatpush2.bf16.msra.mxu0 0
    %1788 = vmatprep.subr.bf16.mxu0 0
    %1789 = vmatpush2.bf16.msra.mxu0 0
    %1790 = vmatprep.subr.bf16.mxu0 0
    %1791 = vmatpush2.bf16.msra.mxu0 0
    %1792 = vmatprep.subr.bf16.mxu0 0
    %1793 = vmatpush2.bf16.msra.mxu0 0
    %1794 = vmatprep.subr.bf16.mxu0 0
    %1795 = vmatpush2.bf16.msra.mxu0 0
    %1796 = vmatprep.subr.bf16.mxu0 0
    %1797 = vmatpush2.bf16.msra.mxu0 0
    %1798 = vmatprep.subr.bf16.mxu0 0
    %1799 = vmatpush2.bf16.msra.mxu0 0
    %1800 = vmatprep.subr.bf16.mxu0 0
    %1801 = vmatpush2.bf16.msra.mxu0 0
    %1802 = vmatprep.mubr.bf16.mxu0 0
    %1803 = vmatmul.mubr.bf16.gmra.mxu0 %v1003
    %v1804 = vpop.f32.mrf.mxu0
    %v1805 = vadd.f32 %v1744, %v1804
    %v1806 = vpop.f32.mrf.mxu0
    %v1807 = vpop.f32.mrf.mxu0
    %v1808 = vpop.f32.mrf.mxu0
    %1809 = vdwg.mxu0
    %v1810 = vmax.f32 %v1805, 0.0
    %v1811 = vpack.c.bf16 %v1810, %v1810
    %v1812 = vld [vmem:[#allocation6] sm:$0xff]
    %v1813 = vld [vmem:[#allocation6 + $0x8] sm:$0xff]
    %v1814 = vld [vmem:[#allocation6 + $0x10] sm:$0xff]
    %v1815 = vld [vmem:[#allocation6 + $0x18] sm:$0xff]
    %v1816 = vld [vmem:[#allocation6 + $0x20] sm:$0xff]
    %v1817 = vld [vmem:[#allocation6 + $0x28] sm:$0xff]
    %v1818 = vld [vmem:[#allocation6 + $0x30] sm:$0xff]
    %v1819 = vld [vmem:[#allocation6 + $0x38] sm:$0xff]
    %v1820 = vld [vmem:[#allocation6 + $0x40] sm:$0xff]
    %v1821 = vld [vmem:[#allocation6 + $0x48] sm:$0xff]
    %v1822 = vld [vmem:[#allocation6 + $0x50] sm:$0xff]
    %v1823 = vld [vmem:[#allocation6 + $0x58] sm:$0xff]
    %v1824 = vld [vmem:[#allocation6 + $0x60] sm:$0xff]
    %v1825 = vld [vmem:[#allocation6 + $0x68] sm:$0xff]
    %v1826 = vld [vmem:[#allocation6 + $0x70] sm:$0xff]
    %v1827 = vld [vmem:[#allocation6 + $0x78] sm:$0xff]
    %v1828 = vld [vmem:[#allocation6 + $0x80] sm:$0xff]
    %v1829 = vld [vmem:[#allocation6 + $0x88] sm:$0xff]
    %v1830 = vld [vmem:[#allocation6 + $0x90] sm:$0xff]
    %v1831 = vld [vmem:[#allocation6 + $0x98] sm:$0xff]
    %v1832 = vld [vmem:[#allocation6 + $0xa0] sm:$0xff]
    %v1833 = vld [vmem:[#allocation6 + $0xa8] sm:$0xff]
    %v1834 = vld [vmem:[#allocation6 + $0xb0] sm:$0xff]
    %v1835 = vld [vmem:[#allocation6 + $0xb8] sm:$0xff]
    %v1836 = vld [vmem:[#allocation6 + $0xc0] sm:$0xff]
    %v1837 = vld [vmem:[#allocation6 + $0xc8] sm:$0xff]
    %v1838 = vld [vmem:[#allocation6 + $0xd0] sm:$0xff]
    %v1839 = vld [vmem:[#allocation6 + $0xd8] sm:$0xff]
    %v1840 = vld [vmem:[#allocation6 + $0xe0] sm:$0xff]
    %v1841 = vld [vmem:[#allocation6 + $0xe8] sm:$0xff]
    %v1842 = vld [vmem:[#allocation6 + $0xf0] sm:$0xff]
    %v1843 = vld [vmem:[#allocation6 + $0xf8] sm:$0xff]
    %v1844 = vld [vmem:[#allocation6 + $0x100] sm:$0xff]
    %v1845 = vld [vmem:[#allocation6 + $0x108] sm:$0xff]
    %v1846 = vld [vmem:[#allocation6 + $0x110] sm:$0xff]
    %v1847 = vld [vmem:[#allocation6 + $0x118] sm:$0xff]
    %v1848 = vld [vmem:[#allocation6 + $0x120] sm:$0xff]
    %v1849 = vld [vmem:[#allocation6 + $0x128] sm:$0xff]
    %v1850 = vld [vmem:[#allocation6 + $0x130] sm:$0xff]
    %v1851 = vld [vmem:[#allocation6 + $0x138] sm:$0xff]
    %v1852 = vld [vmem:[#allocation6 + $0x140] sm:$0xff]
    %v1853 = vld [vmem:[#allocation6 + $0x148] sm:$0xff]
    %v1854 = vld [vmem:[#allocation6 + $0x150] sm:$0xff]
    %v1855 = vld [vmem:[#allocation6 + $0x158] sm:$0xff]
    %v1856 = vld [vmem:[#allocation6 + $0x160] sm:$0xff]
    %v1857 = vld [vmem:[#allocation6 + $0x168] sm:$0xff]
    %v1858 = vld [vmem:[#allocation6 + $0x170] sm:$0xff]
    %v1859 = vld [vmem:[#allocation6 + $0x178] sm:$0xff]
    %v1860 = vld [vmem:[#allocation6 + $0x180] sm:$0xff]
    %v1861 = vld [vmem:[#allocation6 + $0x188] sm:$0xff]
    %v1862 = vld [vmem:[#allocation6 + $0x190] sm:$0xff]
    %v1863 = vld [vmem:[#allocation6 + $0x198] sm:$0xff]
    %v1864 = vld [vmem:[#allocation6 + $0x1a0] sm:$0xff]
    %v1865 = vld [vmem:[#allocation6 + $0x1a8] sm:$0xff]
    %v1866 = vld [vmem:[#allocation6 + $0x1b0] sm:$0xff]
    %v1867 = vld [vmem:[#allocation6 + $0x1b8] sm:$0xff]
    %v1868 = vld [vmem:[#allocation6 + $0x1c0] sm:$0xff]
    %v1869 = vld [vmem:[#allocation6 + $0x1c8] sm:$0xff]
    %v1870 = vld [vmem:[#allocation6 + $0x1d0] sm:$0xff]
    %v1871 = vld [vmem:[#allocation6 + $0x1d8] sm:$0xff]
    %v1872 = vld [vmem:[#allocation6 + $0x1e0] sm:$0xff]
    %v1873 = vld [vmem:[#allocation6 + $0x1e8] sm:$0xff]
    %v1874 = vld [vmem:[#allocation6 + $0x1f0] sm:$0xff]
    %v1875 = vld [vmem:[#allocation6 + $0x1f8] sm:$0xff]
    %v1876 = vld [vmem:[%s13] sm:$0xff]
    %v1878 = vlaneseq
    %v1879 = vshrl.u32 %v1878, 7
    %v1880 = vsub.s32 0, %v1879
    %v1881 = vrot.slane %v1876, %v1880
    %v1882 = vlaneseq
    %v1883 = vshrl.u32 %v1882, 7
    %v1884 = vsub.s32 1, %v1883
    %v1885 = vrot.slane %v1876, %v1884
    %v1886 = vlaneseq
    %v1887 = vshrl.u32 %v1886, 7
    %v1888 = vsub.s32 2, %v1887
    %v1889 = vrot.slane %v1876, %v1888
    %v1890 = vlaneseq
    %v1891 = vshrl.u32 %v1890, 7
    %v1892 = vsub.s32 3, %v1891
    %v1893 = vrot.slane %v1876, %v1892
    %v1894 = vlaneseq
    %v1895 = vshrl.u32 %v1894, 7
    %v1896 = vsub.s32 4, %v1895
    %v1897 = vrot.slane %v1876, %v1896
    %v1898 = vlaneseq
    %v1899 = vshrl.u32 %v1898, 7
    %v1900 = vsub.s32 5, %v1899
    %v1901 = vrot.slane %v1876, %v1900
    %v1902 = vlaneseq
    %v1903 = vshrl.u32 %v1902, 7
    %v1904 = vsub.s32 6, %v1903
    %v1905 = vrot.slane %v1876, %v1904
    %v1906 = vlaneseq
    %v1907 = vshrl.u32 %v1906, 7
    %v1908 = vsub.s32 7, %v1907
    %v1909 = vrot.slane %v1876, %v1908
    %v1982 = vunpack.c.l.b16 %v1812
    %v1983 = vunpack.c.h.b16 %v1812
    %v1984 = vunpack.c.l.b16 %v1813
    %v1985 = vunpack.c.h.b16 %v1813
    %v1986 = vunpack.c.l.b16 %v1814
    %v1987 = vunpack.c.h.b16 %v1814
    %v1988 = vunpack.c.l.b16 %v1815
    %v1989 = vunpack.c.h.b16 %v1815
    %v1990 = vunpack.c.l.b16 %v1816
    %v1991 = vunpack.c.h.b16 %v1816
    %v1992 = vunpack.c.l.b16 %v1817
    %v1993 = vunpack.c.h.b16 %v1817
    %v1994 = vunpack.c.l.b16 %v1818
    %v1995 = vunpack.c.h.b16 %v1818
    %v1996 = vunpack.c.l.b16 %v1819
    %v1997 = vunpack.c.h.b16 %v1819
    %v1998 = vunpack.c.l.b16 %v1820
    %v1999 = vunpack.c.h.b16 %v1820
    %v2000 = vunpack.c.l.b16 %v1821
    %v2001 = vunpack.c.h.b16 %v1821
    %v2002 = vunpack.c.l.b16 %v1822
    %v2003 = vunpack.c.h.b16 %v1822
    %v2004 = vunpack.c.l.b16 %v1823
    %v2005 = vunpack.c.h.b16 %v1823
    %v2006 = vunpack.c.l.b16 %v1824
    %v2007 = vunpack.c.h.b16 %v1824
    %v2008 = vunpack.c.l.b16 %v1825
    %v2009 = vunpack.c.h.b16 %v1825
    %v2010 = vunpack.c.l.b16 %v1826
    %v2011 = vunpack.c.h.b16 %v1826
    %v2012 = vunpack.c.l.b16 %v1827
    %v2013 = vunpack.c.h.b16 %v1827
    %v2014 = vunpack.c.l.b16 %v1828
    %v2015 = vunpack.c.h.b16 %v1828
    %v2016 = vunpack.c.l.b16 %v1829
    %v2017 = vunpack.c.h.b16 %v1829
    %v2018 = vunpack.c.l.b16 %v1830
    %v2019 = vunpack.c.h.b16 %v1830
    %v2020 = vunpack.c.l.b16 %v1831
    %v2021 = vunpack.c.h.b16 %v1831
    %v2022 = vunpack.c.l.b16 %v1832
    %v2023 = vunpack.c.h.b16 %v1832
    %v2024 = vunpack.c.l.b16 %v1833
    %v2025 = vunpack.c.h.b16 %v1833
    %v2026 = vunpack.c.l.b16 %v1834
    %v2027 = vunpack.c.h.b16 %v1834
    %v2028 = vunpack.c.l.b16 %v1835
    %v2029 = vunpack.c.h.b16 %v1835
    %v2030 = vunpack.c.l.b16 %v1836
    %v2031 = vunpack.c.h.b16 %v1836
    %v2032 = vunpack.c.l.b16 %v1837
    %v2033 = vunpack.c.h.b16 %v1837
    %v2034 = vunpack.c.l.b16 %v1838
    %v2035 = vunpack.c.h.b16 %v1838
    %v2036 = vunpack.c.l.b16 %v1839
    %v2037 = vunpack.c.h.b16 %v1839
    %v2038 = vunpack.c.l.b16 %v1840
    %v2039 = vunpack.c.h.b16 %v1840
    %v2040 = vunpack.c.l.b16 %v1841
    %v2041 = vunpack.c.h.b16 %v1841
    %v2042 = vunpack.c.l.b16 %v1842
    %v2043 = vunpack.c.h.b16 %v1842
    %v2044 = vunpack.c.l.b16 %v1843
    %v2045 = vunpack.c.h.b16 %v1843
    %v2046 = vunpack.c.l.b16 %v1844
    %v2047 = vunpack.c.h.b16 %v1844
    %v2048 = vunpack.c.l.b16 %v1845
    %v2049 = vunpack.c.h.b16 %v1845
    %v2050 = vunpack.c.l.b16 %v1846
    %v2051 = vunpack.c.h.b16 %v1846
    %v2052 = vunpack.c.l.b16 %v1847
    %v2053 = vunpack.c.h.b16 %v1847
    %v2054 = vunpack.c.l.b16 %v1848
    %v2055 = vunpack.c.h.b16 %v1848
    %v2056 = vunpack.c.l.b16 %v1849
    %v2057 = vunpack.c.h.b16 %v1849
    %v2058 = vunpack.c.l.b16 %v1850
    %v2059 = vunpack.c.h.b16 %v1850
    %v2060 = vunpack.c.l.b16 %v1851
    %v2061 = vunpack.c.h.b16 %v1851
    %v2062 = vunpack.c.l.b16 %v1852
    %v2063 = vunpack.c.h.b16 %v1852
    %v2064 = vunpack.c.l.b16 %v1853
    %v2065 = vunpack.c.h.b16 %v1853
    %v2066 = vunpack.c.l.b16 %v1854
    %v2067 = vunpack.c.h.b16 %v1854
    %v2068 = vunpack.c.l.b16 %v1855
    %v2069 = vunpack.c.h.b16 %v1855
    %v2070 = vunpack.c.l.b16 %v1856
    %v2071 = vunpack.c.h.b16 %v1856
    %v2072 = vunpack.c.l.b16 %v1857
    %v2073 = vunpack.c.h.b16 %v1857
    %v2074 = vunpack.c.l.b16 %v1858
    %v2075 = vunpack.c.h.b16 %v1858
    %v2076 = vunpack.c.l.b16 %v1859
    %v2077 = vunpack.c.h.b16 %v1859
    %v2078 = vunpack.c.l.b16 %v1860
    %v2079 = vunpack.c.h.b16 %v1860
    %v2080 = vunpack.c.l.b16 %v1861
    %v2081 = vunpack.c.h.b16 %v1861
    %v2082 = vunpack.c.l.b16 %v1862
    %v2083 = vunpack.c.h.b16 %v1862
    %v2084 = vunpack.c.l.b16 %v1863
    %v2085 = vunpack.c.h.b16 %v1863
    %v2086 = vunpack.c.l.b16 %v1864
    %v2087 = vunpack.c.h.b16 %v1864
    %v2088 = vunpack.c.l.b16 %v1865
    %v2089 = vunpack.c.h.b16 %v1865
    %v2090 = vunpack.c.l.b16 %v1866
    %v2091 = vunpack.c.h.b16 %v1866
    %v2092 = vunpack.c.l.b16 %v1867
    %v2093 = vunpack.c.h.b16 %v1867
    %v2094 = vunpack.c.l.b16 %v1868
    %v2095 = vunpack.c.h.b16 %v1868
    %v2096 = vunpack.c.l.b16 %v1869
    %v2097 = vunpack.c.h.b16 %v1869
    %v2098 = vunpack.c.l.b16 %v1870
    %v2099 = vunpack.c.h.b16 %v1870
    %v2100 = vunpack.c.l.b16 %v1871
    %v2101 = vunpack.c.h.b16 %v1871
    %v2102 = vunpack.c.l.b16 %v1872
    %v2103 = vunpack.c.h.b16 %v1872
    %v2104 = vunpack.c.l.b16 %v1873
    %v2105 = vunpack.c.h.b16 %v1873
    %v2106 = vunpack.c.l.b16 %v1874
    %v2107 = vunpack.c.h.b16 %v1874
    %v2108 = vunpack.c.l.b16 %v1875
    %v2109 = vunpack.c.h.b16 %v1875
    %v2110 = vpack.c.b16 %v1990, %v1982
    %v2111 = vpack.c.b16 %v1991, %v1983
    %v2112 = vpack.c.b16 %v1992, %v1984
    %v2113 = vpack.c.b16 %v1993, %v1985
    %v2114 = vpack.c.b16 %v1994, %v1986
    %v2115 = vpack.c.b16 %v1995, %v1987
    %v2116 = vpack.c.b16 %v1996, %v1988
    %v2117 = vpack.c.b16 %v1997, %v1989
    %v2118 = vpack.c.b16 %v2006, %v1998
    %v2119 = vpack.c.b16 %v2007, %v1999
    %v2120 = vpack.c.b16 %v2008, %v2000
    %v2121 = vpack.c.b16 %v2009, %v2001
    %v2122 = vpack.c.b16 %v2010, %v2002
    %v2123 = vpack.c.b16 %v2011, %v2003
    %v2124 = vpack.c.b16 %v2012, %v2004
    %v2125 = vpack.c.b16 %v2013, %v2005
    %v2126 = vpack.c.b16 %v2022, %v2014
    %v2127 = vpack.c.b16 %v2023, %v2015
    %v2128 = vpack.c.b16 %v2024, %v2016
    %v2129 = vpack.c.b16 %v2025, %v2017
    %v2130 = vpack.c.b16 %v2026, %v2018
    %v2131 = vpack.c.b16 %v2027, %v2019
    %v2132 = vpack.c.b16 %v2028, %v2020
    %v2133 = vpack.c.b16 %v2029, %v2021
    %v2134 = vpack.c.b16 %v2038, %v2030
    %v2135 = vpack.c.b16 %v2039, %v2031
    %v2136 = vpack.c.b16 %v2040, %v2032
    %v2137 = vpack.c.b16 %v2041, %v2033
    %v2138 = vpack.c.b16 %v2042, %v2034
    %v2139 = vpack.c.b16 %v2043, %v2035
    %v2140 = vpack.c.b16 %v2044, %v2036
    %v2141 = vpack.c.b16 %v2045, %v2037
    %v2142 = vpack.c.b16 %v2054, %v2046
    %v2143 = vpack.c.b16 %v2055, %v2047
    %v2144 = vpack.c.b16 %v2056, %v2048
    %v2145 = vpack.c.b16 %v2057, %v2049
    %v2146 = vpack.c.b16 %v2058, %v2050
    %v2147 = vpack.c.b16 %v2059, %v2051
    %v2148 = vpack.c.b16 %v2060, %v2052
    %v2149 = vpack.c.b16 %v2061, %v2053
    %v2150 = vpack.c.b16 %v2070, %v2062
    %v2151 = vpack.c.b16 %v2071, %v2063
    %v2152 = vpack.c.b16 %v2072, %v2064
    %v2153 = vpack.c.b16 %v2073, %v2065
    %v2154 = vpack.c.b16 %v2074, %v2066
    %v2155 = vpack.c.b16 %v2075, %v2067
    %v2156 = vpack.c.b16 %v2076, %v2068
    %v2157 = vpack.c.b16 %v2077, %v2069
    %v2158 = vpack.c.b16 %v2086, %v2078
    %v2159 = vpack.c.b16 %v2087, %v2079
    %v2160 = vpack.c.b16 %v2088, %v2080
    %v2161 = vpack.c.b16 %v2089, %v2081
    %v2162 = vpack.c.b16 %v2090, %v2082
    %v2163 = vpack.c.b16 %v2091, %v2083
    %v2164 = vpack.c.b16 %v2092, %v2084
    %v2165 = vpack.c.b16 %v2093, %v2085
    %v2166 = vpack.c.b16 %v2102, %v2094
    %v2167 = vpack.c.b16 %v2103, %v2095
    %v2168 = vpack.c.b16 %v2104, %v2096
    %v2169 = vpack.c.b16 %v2105, %v2097
    %v2170 = vpack.c.b16 %v2106, %v2098
    %v2171 = vpack.c.b16 %v2107, %v2099
    %v2172 = vpack.c.b16 %v2108, %v2100
    %v2173 = vpack.c.b16 %v2109, %v2101
    %2238 = vmatprep.subr.bf16.mxu0 %v2167
    %2239 = vmatpush1.bf16.msra.mxu0 %v2166
    %2240 = vmatprep.subr.bf16.mxu0 %v2159
    %2241 = vmatpush1.bf16.msra.mxu0 %v2158
    %2242 = vmatprep.subr.bf16.mxu0 %v2151
    %2243 = vmatpush1.bf16.msra.mxu0 %v2150
    %2244 = vmatprep.subr.bf16.mxu0 %v2143
    %2245 = vmatpush1.bf16.msra.mxu0 %v2142
    %2246 = vmatprep.subr.bf16.mxu0 %v2135
    %2247 = vmatpush1.bf16.msra.mxu0 %v2134
    %2248 = vmatprep.subr.bf16.mxu0 %v2127
    %2249 = vmatpush1.bf16.msra.mxu0 %v2126
    %2250 = vmatprep.subr.bf16.mxu0 %v2119
    %2251 = vmatpush1.bf16.msra.mxu0 %v2118
    %2252 = vmatprep.subr.bf16.mxu0 %v2111
    %2253 = vmatpush1.bf16.msra.mxu0 %v2110
    %2254 = vmatprep.subr.bf16.mxu0 0
    %2255 = vmatpush2.bf16.msra.mxu0 0
    %2256 = vmatprep.subr.bf16.mxu0 0
    %2257 = vmatpush2.bf16.msra.mxu0 0
    %2258 = vmatprep.subr.bf16.mxu0 0
    %2259 = vmatpush2.bf16.msra.mxu0 0
    %2260 = vmatprep.subr.bf16.mxu0 0
    %2261 = vmatpush2.bf16.msra.mxu0 0
    %2262 = vmatprep.subr.bf16.mxu0 0
    %2263 = vmatpush2.bf16.msra.mxu0 0
    %2264 = vmatprep.subr.bf16.mxu0 0
    %2265 = vmatpush2.bf16.msra.mxu0 0
    %2266 = vmatprep.subr.bf16.mxu0 0
    %2267 = vmatpush2.bf16.msra.mxu0 0
    %2268 = vmatprep.subr.bf16.mxu0 0
    %2269 = vmatpush2.bf16.msra.mxu0 0
    %2270 = vmatprep.mubr.bf16.mxu0 0
    %2271 = vmatmul.mubr.bf16.gmra.mxu0 %v1811
    %v2272 = vpop.f32.mrf.mxu0
    %v2273 = vadd.f32 %v1881, %v2272
    %v2274 = vpop.f32.mrf.mxu0
    %v2275 = vadd.f32 %v1885, %v2274
    %v2276 = vpop.f32.mrf.mxu0
    %v2277 = vpop.f32.mrf.mxu0
    %2278 = vdwg.mxu0
    %2279 = vmatprep.subr.bf16.mxu0 %v2169
    %2280 = vmatpush1.bf16.msra.mxu0 %v2168
    %2281 = vmatprep.subr.bf16.mxu0 %v2161
    %2282 = vmatpush1.bf16.msra.mxu0 %v2160
    %2283 = vmatprep.subr.bf16.mxu0 %v2153
    %2284 = vmatpush1.bf16.msra.mxu0 %v2152
    %2285 = vmatprep.subr.bf16.mxu0 %v2145
    %2286 = vmatpush1.bf16.msra.mxu0 %v2144
    %2287 = vmatprep.subr.bf16.mxu0 %v2137
    %2288 = vmatpush1.bf16.msra.mxu0 %v2136
    %2289 = vmatprep.subr.bf16.mxu0 %v2129
    %2290 = vmatpush1.bf16.msra.mxu0 %v2128
    %2291 = vmatprep.subr.bf16.mxu0 %v2121
    %2292 = vmatpush1.bf16.msra.mxu0 %v2120
    %2293 = vmatprep.subr.bf16.mxu0 %v2113
    %2294 = vmatpush1.bf16.msra.mxu0 %v2112
    %2295 = vmatprep.subr.bf16.mxu0 0
    %2296 = vmatpush2.bf16.msra.mxu0 0
    %2297 = vmatprep.subr.bf16.mxu0 0
    %2298 = vmatpush2.bf16.msra.mxu0 0
    %2299 = vmatprep.subr.bf16.mxu0 0
    %2300 = vmatpush2.bf16.msra.mxu0 0
    %2301 = vmatprep.subr.bf16.mxu0 0
    %2302 = vmatpush2.bf16.msra.mxu0 0
    %2303 = vmatprep.subr.bf16.mxu0 0
    %2304 = vmatpush2.bf16.msra.mxu0 0
    %2305 = vmatprep.subr.bf16.mxu0 0
    %2306 = vmatpush2.bf16.msra.mxu0 0
    %2307 = vmatprep.subr.bf16.mxu0 0
    %2308 = vmatpush2.bf16.msra.mxu0 0
    %2309 = vmatprep.subr.bf16.mxu0 0
    %2310 = vmatpush2.bf16.msra.mxu0 0
    %2311 = vmatprep.mubr.bf16.mxu0 0
    %2312 = vmatmul.mubr.bf16.gmra.mxu0 %v1811
    %v2313 = vpop.f32.mrf.mxu0
    %v2314 = vadd.f32 %v1889, %v2313
    %v2315 = vpop.f32.mrf.mxu0
    %v2316 = vadd.f32 %v1893, %v2315
    %v2317 = vpop.f32.mrf.mxu0
    %v2318 = vpop.f32.mrf.mxu0
    %2319 = vdwg.mxu0
    %2320 = vmatprep.subr.bf16.mxu0 %v2171
    %2321 = vmatpush1.bf16.msra.mxu0 %v2170
    %2322 = vmatprep.subr.bf16.mxu0 %v2163
    %2323 = vmatpush1.bf16.msra.mxu0 %v2162
    %2324 = vmatprep.subr.bf16.mxu0 %v2155
    %2325 = vmatpush1.bf16.msra.mxu0 %v2154
    %2326 = vmatprep.subr.bf16.mxu0 %v2147
    %2327 = vmatpush1.bf16.msra.mxu0 %v2146
    %2328 = vmatprep.subr.bf16.mxu0 %v2139
    %2329 = vmatpush1.bf16.msra.mxu0 %v2138
    %2330 = vmatprep.subr.bf16.mxu0 %v2131
    %2331 = vmatpush1.bf16.msra.mxu0 %v2130
    %2332 = vmatprep.subr.bf16.mxu0 %v2123
    %2333 = vmatpush1.bf16.msra.mxu0 %v2122
    %2334 = vmatprep.subr.bf16.mxu0 %v2115
    %2335 = vmatpush1.bf16.msra.mxu0 %v2114
    %2336 = vmatprep.subr.bf16.mxu0 0
    %2337 = vmatpush2.bf16.msra.mxu0 0
    %2338 = vmatprep.subr.bf16.mxu0 0
    %2339 = vmatpush2.bf16.msra.mxu0 0
    %2340 = vmatprep.subr.bf16.mxu0 0
    %2341 = vmatpush2.bf16.msra.mxu0 0
    %2342 = vmatprep.subr.bf16.mxu0 0
    %2343 = vmatpush2.bf16.msra.mxu0 0
    %2344 = vmatprep.subr.bf16.mxu0 0
    %2345 = vmatpush2.bf16.msra.mxu0 0
    %2346 = vmatprep.subr.bf16.mxu0 0
    %2347 = vmatpush2.bf16.msra.mxu0 0
    %2348 = vmatprep.subr.bf16.mxu0 0
    %2349 = vmatpush2.bf16.msra.mxu0 0
    %2350 = vmatprep.subr.bf16.mxu0 0
    %2351 = vmatpush2.bf16.msra.mxu0 0
    %2352 = vmatprep.mubr.bf16.mxu0 0
    %2353 = vmatmul.mubr.bf16.gmra.mxu0 %v1811
    %v2354 = vpop.f32.mrf.mxu0
    %v2355 = vadd.f32 %v1897, %v2354
    %v2356 = vpop.f32.mrf.mxu0
    %v2357 = vadd.f32 %v1901, %v2356
    %v2358 = vpop.f32.mrf.mxu0
    %v2359 = vpop.f32.mrf.mxu0
    %2360 = vdwg.mxu0
    %2361 = vmatprep.subr.bf16.mxu0 %v2173
    %2362 = vmatpush1.bf16.msra.mxu0 %v2172
    %2363 = vmatprep.subr.bf16.mxu0 %v2165
    %2364 = vmatpush1.bf16.msra.mxu0 %v2164
    %2365 = vmatprep.subr.bf16.mxu0 %v2157
    %2366 = vmatpush1.bf16.msra.mxu0 %v2156
    %2367 = vmatprep.subr.bf16.mxu0 %v2149
    %2368 = vmatpush1.bf16.msra.mxu0 %v2148
    %2369 = vmatprep.subr.bf16.mxu0 %v2141
    %2370 = vmatpush1.bf16.msra.mxu0 %v2140
    %2371 = vmatprep.subr.bf16.mxu0 %v2133
    %2372 = vmatpush1.bf16.msra.mxu0 %v2132
    %2373 = vmatprep.subr.bf16.mxu0 %v2125
    %2374 = vmatpush1.bf16.msra.mxu0 %v2124
    %2375 = vmatprep.subr.bf16.mxu0 %v2117
    %2376 = vmatpush1.bf16.msra.mxu0 %v2116
    %2377 = vmatprep.subr.bf16.mxu0 0
    %2378 = vmatpush2.bf16.msra.mxu0 0
    %2379 = vmatprep.subr.bf16.mxu0 0
    %2380 = vmatpush2.bf16.msra.mxu0 0
    %2381 = vmatprep.subr.bf16.mxu0 0
    %2382 = vmatpush2.bf16.msra.mxu0 0
    %2383 = vmatprep.subr.bf16.mxu0 0
    %2384 = vmatpush2.bf16.msra.mxu0 0
    %2385 = vmatprep.subr.bf16.mxu0 0
    %2386 = vmatpush2.bf16.msra.mxu0 0
    %2387 = vmatprep.subr.bf16.mxu0 0
    %2388 = vmatpush2.bf16.msra.mxu0 0
    %2389 = vmatprep.subr.bf16.mxu0 0
    %2390 = vmatpush2.bf16.msra.mxu0 0
    %2391 = vmatprep.subr.bf16.mxu0 0
    %2392 = vmatpush2.bf16.msra.mxu0 0
    %2393 = vmatprep.mubr.bf16.mxu0 0
    %2394 = vmatmul.mubr.bf16.gmra.mxu0 %v1811
    %v2395 = vpop.f32.mrf.mxu0
    %v2396 = vadd.f32 %v1905, %v2395
    %v2397 = vpop.f32.mrf.mxu0
    %v2398 = vadd.f32 %v1909, %v2397
    %v2399 = vpop.f32.mrf.mxu0
    %v2400 = vpop.f32.mrf.mxu0
    %2401 = vdwg.mxu0
    %v2402 = vxor.u32 %v2273, 2147483648
    %v2403 = vxor.u32 %v2275, 2147483648
    %v2404 = vxor.u32 %v2314, 2147483648
    %v2405 = vxor.u32 %v2316, 2147483648
    %v2406 = vxor.u32 %v2355, 2147483648
    %v2407 = vxor.u32 %v2357, 2147483648
    %v2408 = vxor.u32 %v2396, 2147483648
    %v2409 = vxor.u32 %v2398, 2147483648
    %v2410 = vmul.f32 %v2402, 1.442695
    %v2411 = vpow.pop %v2410
    %v2412 = vmul.f32 %v2403, 1.442695
    %v2413 = vpow.pop %v2412
    %v2414 = vmul.f32 %v2404, 1.442695
    %v2415 = vpow.pop %v2414
    %v2416 = vmul.f32 %v2405, 1.442695
    %v2417 = vpow.pop %v2416
    %v2418 = vmul.f32 %v2406, 1.442695
    %v2419 = vpow.pop %v2418
    %v2420 = vmul.f32 %v2407, 1.442695
    %v2421 = vpow.pop %v2420
    %v2422 = vmul.f32 %v2408, 1.442695
    %v2423 = vpow.pop %v2422
    %v2424 = vmul.f32 %v2409, 1.442695
    %v2425 = vpow.pop %v2424
    %v2426 = vadd.f32 %v2411, 1.0
    %v2427 = vadd.f32 %v2413, 1.0
    %v2428 = vadd.f32 %v2415, 1.0
    %v2429 = vadd.f32 %v2417, 1.0
    %v2430 = vadd.f32 %v2419, 1.0
    %v2431 = vadd.f32 %v2421, 1.0
    %v2432 = vadd.f32 %v2423, 1.0
    %v2433 = vadd.f32 %v2425, 1.0
    %v2434 = vrcp.pop %v2426
    %v2435 = vmul.f32 1.0, %v2434
    %v2436 = vrcp.pop %v2427
    %v2437 = vmul.f32 1.0, %v2436
    %v2438 = vrcp.pop %v2428
    %v2439 = vmul.f32 1.0, %v2438
    %v2440 = vrcp.pop %v2429
    %v2441 = vmul.f32 1.0, %v2440
    %v2442 = vrcp.pop %v2430
    %v2443 = vmul.f32 1.0, %v2442
    %v2444 = vrcp.pop %v2431
    %v2445 = vmul.f32 1.0, %v2444
    %v2446 = vrcp.pop %v2432
    %v2447 = vmul.f32 1.0, %v2446
    %v2448 = vrcp.pop %v2433
    %v2449 = vmul.f32 1.0, %v2448
    %v2458 = vcombine.low %v2435, %v2437
    %v2459 = vcombine.low %v2439, %v2441
    %v2461 = vunpack.c.l.s4 1983009808
    %v2462 = vunpack.c.0.s8 %v2461
    %v2463 = vlaneseq
    %v2464 = vshrl.u32 %v2463, 7
    %v2465 = vsub.s32 %v2462, %v2464
    %v2466 = vrot.slane %v2458, %v2465
    %v2468 = vunpack.c.l.s4 1983009808
    %v2469 = vunpack.c.0.s8 %v2468
    %v2470 = vlaneseq
    %v2471 = vshrl.u32 %v2470, 7
    %v2472 = vsub.s32 %v2469, %v2471
    %v2473 = vrot.slane %v2459, %v2472
    %v2474 = vcombine.low %v2466, %v2473
    %v2475 = vcombine.low %v2443, %v2445
    %v2476 = vcombine.low %v2447, %v2449
    %v2478 = vunpack.c.l.s4 1983009808
    %v2479 = vunpack.c.0.s8 %v2478
    %v2480 = vlaneseq
    %v2481 = vshrl.u32 %v2480, 7
    %v2482 = vsub.s32 %v2479, %v2481
    %v2483 = vrot.slane %v2475, %v2482
    %v2485 = vunpack.c.l.s4 1983009808
    %v2486 = vunpack.c.0.s8 %v2485
    %v2487 = vlaneseq
    %v2488 = vshrl.u32 %v2487, 7
    %v2489 = vsub.s32 %v2486, %v2488
    %v2490 = vrot.slane %v2476, %v2489
    %v2491 = vcombine.low %v2483, %v2490
    %2494 = vst [vmem:[%s17] sm:$0xff] %v2474
    %2495 = vst [vmem:[%s17 + $0x8] sm:$0xff] %v2491
    %v2496 = vld [vmem:[%s14] sm:$0xf]
    %v2497 = vld [vmem:[%s14 + $0x4] sm:$0xf]
    %v2498 = vld [vmem:[%s14 + $0x8] sm:$0xf]
    %v2499 = vld [vmem:[%s14 + $0xc] sm:$0xf]
    %v2500 = vld [vmem:[%s14 + $0x10] sm:$0xf]
    %v2501 = vld [vmem:[%s14 + $0x14] sm:$0xf]
    %v2502 = vld [vmem:[%s14 + $0x18] sm:$0xf]
    %v2503 = vld [vmem:[%s14 + $0x1c] sm:$0xf]
    %v2504 = vld [vmem:[%s15] sm:$0x1]
    %v2506 = vlaneseq
    %v2507 = vshrl.u32 %v2506, 7
    %v2508 = vsub.s32 0, %v2507
    %v2509 = vrot.slane %v2504, %v2508
    %v2519 = vunpack.c.l.b16 %v2496
    %v2520 = vunpack.c.l.b16 %v2497
    %v2521 = vunpack.c.l.b16 %v2498
    %v2522 = vunpack.c.l.b16 %v2499
    %v2523 = vunpack.c.l.b16 %v2500
    %v2524 = vunpack.c.l.b16 %v2501
    %v2525 = vunpack.c.l.b16 %v2502
    %v2526 = vunpack.c.l.b16 %v2503
    %v2527 = vpack.c.b16 %v2520, %v2519
    %v2528 = vpack.c.b16 %v2522, %v2521
    %v2529 = vpack.c.b16 %v2524, %v2523
    %v2530 = vpack.c.b16 %v2526, %v2525
    %2535 = vmatprep.subr.bf16.mxu0 0
    %2536 = vmatpush1.bf16.msra.mxu0 0
    %2537 = vmatprep.subr.bf16.mxu0 0
    %2538 = vmatpush1.bf16.msra.mxu0 0
    %2539 = vmatprep.subr.bf16.mxu0 0
    %2540 = vmatpush1.bf16.msra.mxu0 0
    %2541 = vmatprep.subr.bf16.mxu0 0
    %2542 = vmatpush1.bf16.msra.mxu0 0
    %2543 = vmatprep.subr.bf16.mxu0 0
    %2544 = vmatpush1.bf16.msra.mxu0 %v2530
    %2545 = vmatprep.subr.bf16.mxu0 0
    %2546 = vmatpush1.bf16.msra.mxu0 %v2529
    %2547 = vmatprep.subr.bf16.mxu0 0
    %2548 = vmatpush1.bf16.msra.mxu0 %v2528
    %2549 = vmatprep.subr.bf16.mxu0 0
    %2550 = vmatpush1.bf16.msra.mxu0 %v2527
    %2551 = vmatprep.subr.bf16.mxu0 0
    %2552 = vmatpush2.bf16.msra.mxu0 0
    %2553 = vmatprep.subr.bf16.mxu0 0
    %2554 = vmatpush2.bf16.msra.mxu0 0
    %2555 = vmatprep.subr.bf16.mxu0 0
    %2556 = vmatpush2.bf16.msra.mxu0 0
    %2557 = vmatprep.subr.bf16.mxu0 0
    %2558 = vmatpush2.bf16.msra.mxu0 0
    %2559 = vmatprep.subr.bf16.mxu0 0
    %2560 = vmatpush2.bf16.msra.mxu0 0
    %2561 = vmatprep.subr.bf16.mxu0 0
    %2562 = vmatpush2.bf16.msra.mxu0 0
    %2563 = vmatprep.subr.bf16.mxu0 0
    %2564 = vmatpush2.bf16.msra.mxu0 0
    %2565 = vmatprep.subr.bf16.mxu0 0
    %2566 = vmatpush2.bf16.msra.mxu0 0
    %2567 = vmatprep.mubr.bf16.mxu0 0
    %2568 = vmatmul.mubr.bf16.gmra.mxu0 %v1003
    %v2569 = vpop.f32.mrf.mxu0
    %v2570 = vadd.f32 %v2509, %v2569
    %v2571 = vpop.f32.mrf.mxu0
    %v2572 = vpop.f32.mrf.mxu0
    %v2573 = vpop.f32.mrf.mxu0
    %2574 = vdwg.mxu0
    %2575 = vst [vmem:[%s19] sm:$0x3] %v2570
    // Predicated region
    $region78: #{disentangled_vae_forward.1} parent=1 // pred_check
      _
    $region79: #{disentangled_vae_forward.1} parent=1 // pred_check_branch
      %2577 = sbr.rel (0) target = $region81
    $region80: #{disentangled_vae_forward.1} parent=1 // pred_region
      _
    $region81: #{disentangled_vae_forward.1} parent=1 // pred_fallthru
      _
    // Predicated region
    $region82: #{disentangled_vae_forward.1} parent=1 // pred_check
      _
    $region83: #{disentangled_vae_forward.1} parent=1 // pred_check_branch
      %2579 = sbr.rel (0) target = $region85
    $region84: #{disentangled_vae_forward.1} parent=1 // pred_region
      _
    $region85: #{disentangled_vae_forward.1} parent=1 // pred_fallthru
      _
    // Predicated region
    $region86: #{disentangled_vae_forward.1} parent=1 // pred_check
      _
    $region87: #{disentangled_vae_forward.1} parent=1 // pred_check_branch
      %2581 = sbr.rel (0) target = $region89
    $region88: #{disentangled_vae_forward.1} parent=1 // pred_region
      _
    $region89: #{disentangled_vae_forward.1} parent=1 // pred_fallthru
      _
    // Predicated region
    $region90: #{disentangled_vae_forward.1} parent=1 // pred_check
      _
    $region91: #{disentangled_vae_forward.1} parent=1 // pred_check_branch
      %2583 = sbr.rel (0) target = $region93
    $region92: #{disentangled_vae_forward.1} parent=1 // pred_region
      _
    $region93: #{disentangled_vae_forward.1} parent=1 // pred_fallthru
      _
    // Predicated region
    $region94: #{disentangled_vae_forward.1} parent=1 // pred_check
      _
    $region95: #{disentangled_vae_forward.1} parent=1 // pred_check_branch
      %2585 = sbr.rel (0) target = $region97
    $region96: #{disentangled_vae_forward.1} parent=1 // pred_region
      _
    $region97: #{disentangled_vae_forward.1} parent=1 // pred_fallthru
      _
    // Predicated region
    $region98: #{disentangled_vae_forward.1} parent=1 // pred_check
      _
    $region99: #{disentangled_vae_forward.1} parent=1 // pred_check_branch
      %2587 = sbr.rel (0) target = $region101
    $region100: #{disentangled_vae_forward.1} parent=1 // pred_region
      _
    $region101: #{disentangled_vae_forward.1} parent=1 // pred_fallthru
      _
    // Predicated region
    $region102: #{disentangled_vae_forward.1} parent=1 // pred_check
      _
    $region103: #{disentangled_vae_forward.1} parent=1 // pred_check_branch
      %2589 = sbr.rel (0) target = $region105
    $region104: #{disentangled_vae_forward.1} parent=1 // pred_region
      _
    $region105: #{disentangled_vae_forward.1} parent=1 // pred_fallthru
      _
    // Predicated region
    $region106: #{disentangled_vae_forward.1} parent=1 // pred_check
      _
    $region107: #{disentangled_vae_forward.1} parent=1 // pred_check_branch
      %2591 = sbr.rel (0) target = $region109
    $region108: #{disentangled_vae_forward.1} parent=1 // pred_region
      _
    $region109: #{disentangled_vae_forward.1} parent=1 // pred_fallthru
      _
    %2592 = vsyncpa [#allocation3], 1
    %2593 = vsyncpa [#allocation5], 1

</llo_original>
